<compile_context>
chip_gen: v5e
topology: v5e:2x2
jax: 0.10.0
libtpu: 0.0.40
codegen_flags: <defaults>
</compile_context>

<pallas_src>
import jax
import jax.numpy as jnp
from jax import lax
from jax.experimental import pallas as pl
from jax.experimental.pallas import tpu as pltpu

# ----------------------------- model dimensions -----------------------------
B = 2          # batch
T = 8          # question length (tokens)
V = 50         # vocab size
E = 16         # word embedding dim
H = 32         # RNN hidden dim (question feature dim)

H1 = 32        # q_linear0 output dim
GQ = 2         # question attention glimpses (q_linear1 output dim)
DQ = GQ * H    # question_attentioned dim = 64

N_OBJ = 8      # number of objects
DO = 32        # object feature dim

HF = 64        # attention_fusion (ConcatMLP) hidden dim
DF = 64        # attention_fusion output dim
HO = 32        # obj_linear0 output dim
GO = 2         # object attention glimpses (obj_linear1 output dim)
DOB = GO * DO  # object_attentioned dim = 64

HG = 64        # final_fusion (ConcatMLP) hidden dim
A = 16         # number of answers (final output dim)

F32 = jnp.float32
LANES = 128

# --------------------------- packed parameter slab ---------------------------
# Single (PARAM_ROWS, 128) f32 slab, lane- AND row-packed:
#   name -> (row_offset, col_offset, rows, cols)
PARAM_LAYOUT = {
    # block 1: rows 0..31 (recurrence + question-attention first linear)
    'U_zr':  (0,   0,   H,        2 * H),   # fused Uz|Ur
    'Uh':    (0,   64,  H,        H),
    'q_w0':  (0,   96,  H,        H1),
    # block 2: rows 32..47 (fused GRU input projection)
    'W_zrh': (32,  0,   E,        3 * H),   # fused Wz|Wr|Wh
    # block 3: rows 48..175
    'Wg0':   (48,  0,   DQ + DOB, HG),      # stacked wg0q over wg0o (K=128)
    'wf0q':  (48,  64,  DQ,       HF),
    'wf1':   (112, 64,  HF,       DF),
    # block 4: rows 176..239
    'wo0':   (176, 0,   DF,       HO),
    'wg1':   (176, 32,  HG,       A),
    'wf0o':  (176, 48,  DO,       HF),
    'q_w1':  (176, 112, H1,       GQ),
    'wo1':   (176, 120, HO,       GO),
    # block 5: rows 240..247 (all biases share 3 rows)
    'b_zrh': (240, 0,   1, 3 * H),
    'q_b0':  (240, 96,  1, H1),
    'bf0':   (241, 0,   1, HF),
    'bf1':   (241, 64,  1, DF),
    'bg0':   (242, 0,   1, HG),
    'bo0':   (242, 64,  1, HO),
    'bg1':   (242, 96,  1, A),
    'q_b1':  (242, 112, 1, GQ),
    'bo1':   (242, 120, 1, GO),
}
PARAM_ROWS = 248


def pack_param_slab(raw):
    entries = dict(raw)
    # fused entries (mathematically identical to the unfused reference)
    entries['W_zrh'] = jnp.concatenate([raw['Wz'], raw['Wr'], raw['Wh']], axis=1)
    entries['b_zrh'] = jnp.concatenate([raw['bz'], raw['br'], raw['bh']], axis=1)
    entries['U_zr'] = jnp.concatenate([raw['Uz'], raw['Ur']], axis=1)
    entries['Wg0'] = jnp.concatenate([raw['wg0q'], raw['wg0o']], axis=0)

    slab = jnp.zeros((PARAM_ROWS, LANES), F32)
    for name, (r0, c0, r, c) in PARAM_LAYOUT.items():
        v = entries[name].astype(F32).reshape(r, c)
        slab = slab.at[r0:r0 + r, c0:c0 + c].set(v)
    return slab


# ------------------------------- fused kernel --------------------------------
def attention_net_kernel(lens_ref, emb_ref, obj_ref, params_ref, out_ref, hs_ref):
    def p(name):
        r0, c0, r, c = PARAM_LAYOUT[name]
        return params_ref[r0:r0 + r, c0:c0 + c]

    # ---------------- text encoder: single-layer GRU ----------------
    # TODO(synk): original txt_enc (pretrained skip-thoughts embedding + GRU)
    # is external; a deterministic randomly-initialised GRU stand-in is used.
    emb = emb_ref[...]                                       # (T*B, E), time-major rows
    # single fused input projection for all three gates (one matmul, 96 lanes)
    x_gates = jnp.dot(emb, p('W_zrh'), preferred_element_type=F32) + p('b_zrh')  # (T*B, 3H)
    U_zr = p('U_zr')
    Uh = p('Uh')

    h = jnp.zeros((B, H), F32)
    for t in range(T):                                       # T=8, unrolled recurrence
        xg = x_gates[t * B:(t + 1) * B, :]                   # (B, 3H)
        zr = jax.nn.sigmoid(xg[:, :2 * H]
                            + jnp.dot(h, U_zr, preferred_element_type=F32))  # (B, 2H)
        z = zr[:, :H]
        r = zr[:, H:2 * H]
        hh = jnp.tanh(xg[:, 2 * H:]
                      + jnp.dot(r * h, Uh, preferred_element_type=F32))
        h = (1.0 - z) * h + z * hh
        hs_ref[:, t, :] = h                                  # VMEM scratch, (B, T, H)

    qf = hs_ref[...]                                         # (B, T, H) question features

    # ---------------- question self-attention (batched over B) ----------------
    qf2d = qf.reshape(B * T, H)
    a0 = jnp.maximum(
        jnp.dot(qf2d, p('q_w0'), preferred_element_type=F32) + p('q_b0'), 0.0)
    q_logits = (jnp.dot(a0, p('q_w1'), preferred_element_type=F32)
                + p('q_b1')).reshape(B, T, GQ)               # (B, T, GQ)

    # masked softmax over time; mask built in-kernel from SMEM lengths.
    # Precondition: question_lengths >= 1 (denominator clamped as a guard).
    t_idx = lax.broadcasted_iota(jnp.int32, (B, T, 1), 1)
    b_idx = lax.broadcasted_iota(jnp.int32, (B, T, 1), 0)
    lens_bc = jnp.zeros((B, T, 1), jnp.int32)
    for b in range(B):
        lens_bc = jnp.where(b_idx == b, lens_ref[b], lens_bc)
    valid = t_idx < lens_bc                                  # (B, T, 1)

    q_logits = jnp.where(valid, q_logits, -1e9)
    m_q = jnp.max(q_logits, axis=1, keepdims=True)
    e_q = jnp.exp(q_logits - m_q)
    den_q = jnp.maximum(jnp.sum(e_q, axis=1, keepdims=True), 1e-30)
    att_q = e_q * pl.reciprocal(den_q, approx=True)          # (B, T, GQ)
    # glimpse sums (GQ=2): broadcast-multiply + sublane reduce, batched over B
    q_att = jnp.concatenate(
        [jnp.sum(att_q[:, :, g:g + 1] * qf, axis=1) for g in range(GQ)],
        axis=1)                                              # (B, DQ)

    # ---------------- object attention conditioned on the question ----------------
    obj = obj_ref[...]                                       # (B*N_OBJ, DO), batch-major
    obj3 = obj.reshape(B, N_OBJ, DO)
    # ConcatMLP fusion: concat(q, obj) @ Wf0 == q @ wf0q + obj @ wf0o
    qh = jnp.dot(q_att, p('wf0q'), preferred_element_type=F32)          # (B, HF)
    oh = jnp.dot(obj, p('wf0o'), preferred_element_type=F32).reshape(B, N_OBJ, HF)
    hfus = jnp.maximum(oh + qh[:, None, :] + p('bf0'), 0.0)             # (B, N, HF)
    fused = (jnp.dot(hfus.reshape(B * N_OBJ, HF), p('wf1'),
                     preferred_element_type=F32) + p('bf1'))            # (B*N, DF)
    a1 = jnp.maximum(
        jnp.dot(fused, p('wo0'), preferred_element_type=F32) + p('bo0'), 0.0)
    o_logits = (jnp.dot(a1, p('wo1'), preferred_element_type=F32)
                + p('bo1')).reshape(B, N_OBJ, GO)            # (B, N, GO)

    m_o = jnp.max(o_logits, axis=1, keepdims=True)
    e_o = jnp.exp(o_logits - m_o)
    den_o = jnp.maximum(jnp.sum(e_o, axis=1, keepdims=True), 1e-30)
    att_o = e_o * pl.reciprocal(den_o, approx=True)          # (B, N, GO)
    o_att = jnp.concatenate(
        [jnp.sum(att_o[:, :, g:g + 1] * obj3, axis=1) for g in range(GO)],
        axis=1)                                              # (B, DOB)

    # ---------------- final fusion + log_softmax over answers ----------------
    qo = jnp.concatenate([q_att, o_att], axis=1)             # (B, DQ+DOB) = (B, 128)
    hg = jnp.maximum(
        jnp.dot(qo, p('Wg0'), preferred_element_type=F32) + p('bg0'), 0.0)
    logits = jnp.dot(hg, p('wg1'), preferred_element_type=F32) + p('bg1')   # (B, A)
    m_l = jnp.max(logits, axis=1, keepdims=True)
    lse = m_l + jnp.log(jnp.sum(jnp.exp(logits - m_l), axis=1, keepdims=True))
    out_ref[...] = logits - lse


# ------------------------------ pallas wrapper --------------------------------
def attention_net_pallas(question_lengths, emb_tb, obj_flat, param_slab):
    return pl.pallas_call(
        attention_net_kernel,
        out_shape=jax.ShapeDtypeStruct((B, A), F32),
        in_specs=[
            pl.BlockSpec(memory_space=pltpu.MemorySpace.SMEM),     # lengths -> SMEM
            pl.BlockSpec((T * B, E), lambda: (0, 0)),              # word embeddings
            pl.BlockSpec((B * N_OBJ, DO), lambda: (0, 0)),         # object features
            pl.BlockSpec((PARAM_ROWS, LANES), lambda: (0, 0)),     # packed params
        ],
        out_specs=pl.BlockSpec((B, A), lambda: (0, 0)),
        scratch_shapes=[pltpu.VMEM((B, T, H), F32)],               # GRU hidden states
    )(question_lengths, emb_tb, obj_flat, param_slab)


# --------------------------------- JAX glue -----------------------------------
def init_params(key):
    def dense(k, i, o, scale=0.1):
        kw, kb = jax.random.split(k)
        return (scale * jax.random.normal(kw, (i, o), F32),
                scale * jax.random.normal(kb, (1, o), F32))

    keys = jax.random.split(key, 12)
    raw = {}
    embedding = 0.1 * jax.random.normal(keys[0], (V, E), F32)
    gk = jax.random.split(keys[1], 6)
    for n, k, shp in (('Wz', gk[0], (E, H)), ('Wr', gk[1], (E, H)), ('Wh', gk[2], (E, H)),
                      ('Uz', gk[3], (H, H)), ('Ur', gk[4], (H, H)), ('Uh', gk[5], (H, H))):
        raw[n] = 0.1 * jax.random.normal(k, shp, F32)
    raw['bz'] = jnp.zeros((1, H), F32)
    raw['br'] = jnp.zeros((1, H), F32)
    raw['bh'] = jnp.zeros((1, H), F32)
    raw['q_w0'], raw['q_b0'] = dense(keys[2], H, H1)
    raw['q_w1'], raw['q_b1'] = dense(keys[3], H1, GQ)
    # attention_fusion ConcatMLP: concat(DQ + DO) -> HF -> DF (ReLU on hidden)
    wf0, bf0 = dense(keys[4], DQ + DO, HF)
    raw['wf0q'], raw['wf0o'], raw['bf0'] = wf0[:DQ], wf0[DQ:], bf0
    raw['wf1'], raw['bf1'] = dense(keys[5], HF, DF)
    raw['wo0'], raw['bo0'] = dense(keys[6], DF, HO)
    raw['wo1'], raw['bo1'] = dense(keys[7], HO, GO)
    # final_fusion ConcatMLP: concat(DQ + DOB) -> HG -> A
    wg0, bg0 = dense(keys[8], DQ + DOB, HG)
    raw['wg0q'], raw['wg0o'], raw['bg0'] = wg0[:DQ], wg0[DQ:], bg0
    raw['wg1'], raw['bg1'] = dense(keys[9], HG, A)
    return {'embedding': embedding, 'slab': pack_param_slab(raw)}


@jax.jit
def attention_net_forward(params, question_ids, question_lengths,
                          object_features_list):
    # glue: embedding lookup + (free) layout flattening of the kernel inputs
    word_emb = params['embedding'][question_ids]                 # (B, T, E)
    emb_tb = jnp.swapaxes(word_emb, 0, 1).reshape(T * B, E)      # time-major rows
    obj_flat = object_features_list.reshape(B * N_OBJ, DO)       # batch-major rows
    return attention_net_pallas(question_lengths.astype(jnp.int32),
                                emb_tb, obj_flat, params['slab'])


if __name__ == "__main__":
    key = jax.random.PRNGKey(0)
    k_params, k_ids, k_len, k_obj = jax.random.split(key, 4)

    params = init_params(k_params)
    question_ids = jax.random.randint(k_ids, (B, T), 1, V)
    question_lengths = jax.random.randint(k_len, (B,), 3, T + 1)
    object_features_list = jax.random.normal(k_obj, (B, N_OBJ, DO), F32)

    out = attention_net_forward(params, question_ids, question_lengths,
                                object_features_list)
    out = jax.block_until_ready(out)

    assert out.shape == (B, A)
    # log-softmax rows should sum to ~1 after exp
    row_sums = jnp.exp(out).sum(axis=1)
    assert jnp.allclose(row_sums, 1.0, atol=1e-4)
    print("KERNEL_OK")
</pallas_src>

<mosaic_0001>
module attributes {stable_mosaic.version = 11 : i64} {
  func.func @attention_net_kernel(%arg0: memref<2xi32, #tpu.memory_space<smem>>, %arg1: memref<16x16xf32, #tpu.memory_space<vmem>>, %arg2: memref<16x32xf32, #tpu.memory_space<vmem>>, %arg3: memref<248x128xf32, #tpu.memory_space<vmem>>, %arg4: memref<2x16xf32, #tpu.memory_space<vmem>>, %arg5: memref<2x8x32xf32, #tpu.memory_space<vmem>>) attributes {dimension_semantics = [], scalar_prefetch = 0 : i64, scratch_operands = 1 : i64, tpu.core_type = #tpu.core_type<tc>} {
    %c0 = arith.constant 0 : index
    %c0_0 = arith.constant 0 : index
    %0 = vector.load %arg1[%c0, %c0_0] : memref<16x16xf32, #tpu.memory_space<vmem>>, vector<16x16xf32>
    %c32 = arith.constant 32 : index
    %c0_1 = arith.constant 0 : index
    %1 = vector.load %arg3[%c32, %c0_1] : memref<248x128xf32, #tpu.memory_space<vmem>>, vector<16x96xf32>
    %cst = arith.constant dense<0.000000e+00> : vector<16x96xf32>
    %2 = tpu.matmul %0, %1, %cst {dimension_numbers = #tpu.dot_dimension_numbers<[1], [0], [0], [1], [0, 0, 1, 1], [], []>} : vector<16x16xf32>, vector<16x96xf32>, vector<16x96xf32> -> vector<16x96xf32>
    %c240 = arith.constant 240 : index
    %c0_2 = arith.constant 0 : index
    %3 = vector.load %arg3[%c240, %c0_2] : memref<248x128xf32, #tpu.memory_space<vmem>>, vector<1x96xf32>
    %4 = vector.broadcast %3 : vector<1x96xf32> to vector<16x96xf32>
    %5 = arith.addf %2, %4 : vector<16x96xf32>
    %c0_3 = arith.constant 0 : index
    %c0_4 = arith.constant 0 : index
    %6 = vector.load %arg3[%c0_3, %c0_4] : memref<248x128xf32, #tpu.memory_space<vmem>>, vector<32x64xf32>
    %c0_5 = arith.constant 0 : index
    %c64 = arith.constant 64 : index
    %7 = vector.load %arg3[%c0_5, %c64] : memref<248x128xf32, #tpu.memory_space<vmem>>, vector<32x32xf32>
    %cst_6 = arith.constant 0.000000e+00 : f32
    %8 = vector.broadcast %cst_6 : f32 to vector<2x32xf32>
    %9 = vector.extract_strided_slice %5 {offsets = [0, 0], sizes = [2, 96], strides = [1, 1]} : vector<16x96xf32> to vector<2x96xf32>
    %10 = vector.extract_strided_slice %9 {offsets = [0, 0], sizes = [2, 64], strides = [1, 1]} : vector<2x96xf32> to vector<2x64xf32>
    %cst_7 = arith.constant dense<0.000000e+00> : vector<2x64xf32>
    %11 = tpu.matmul %8, %6, %cst_7 {dimension_numbers = #tpu.dot_dimension_numbers<[1], [0], [0], [1], [0, 0, 1, 1], [], []>} : vector<2x32xf32>, vector<32x64xf32>, vector<2x64xf32> -> vector<2x64xf32>
    %12 = arith.addf %10, %11 : vector<2x64xf32>
    %13 = arith.negf %12 : vector<2x64xf32>
    %14 = math.exp %13 : vector<2x64xf32>
    %cst_8 = arith.constant 1.000000e+00 : f32
    %15 = vector.broadcast %cst_8 : f32 to vector<2x64xf32>
    %16 = arith.addf %15, %14 : vector<2x64xf32>
    %17 = arith.divf %15, %16 : vector<2x64xf32>
    %18 = vector.extract_strided_slice %17 {offsets = [0, 0], sizes = [2, 32], strides = [1, 1]} : vector<2x64xf32> to vector<2x32xf32>
    %19 = vector.extract_strided_slice %17 {offsets = [0, 32], sizes = [2, 32], strides = [1, 1]} : vector<2x64xf32> to vector<2x32xf32>
    %20 = vector.extract_strided_slice %9 {offsets = [0, 64], sizes = [2, 32], strides = [1, 1]} : vector<2x96xf32> to vector<2x32xf32>
    %21 = arith.mulf %19, %8 : vector<2x32xf32>
    %cst_9 = arith.constant dense<0.000000e+00> : vector<2x32xf32>
    %22 = tpu.matmul %21, %7, %cst_9 {dimension_numbers = #tpu.dot_dimension_numbers<[1], [0], [0], [1], [0, 0, 1, 1], [], []>} : vector<2x32xf32>, vector<32x32xf32>, vector<2x32xf32> -> vector<2x32xf32>
    %23 = arith.addf %20, %22 : vector<2x32xf32>
    %24 = math.tanh %23 : vector<2x32xf32>
    %cst_10 = arith.constant 1.000000e+00 : f32
    %25 = vector.broadcast %cst_10 : f32 to vector<2x32xf32>
    %26 = arith.subf %25, %18 : vector<2x32xf32>
    %27 = arith.mulf %26, %8 : vector<2x32xf32>
    %28 = arith.mulf %18, %24 : vector<2x32xf32>
    %29 = arith.addf %27, %28 : vector<2x32xf32>
    %c0_11 = arith.constant 0 : index
    %c0_12 = arith.constant 0 : index
    %c0_13 = arith.constant 0 : index
    %30 = vector.load %arg5[%c0_11, %c0_12, %c0_13] : memref<2x8x32xf32, #tpu.memory_space<vmem>>, vector<2x1x32xf32>
    %31 = vector.shape_cast %30 : vector<2x1x32xf32> to vector<2x32xf32>
    %32 = vector.shape_cast %29 : vector<2x32xf32> to vector<2x1x32xf32>
    tpu.vector_store %arg5[%c0_11, %c0_12, %c0_13], %32 {strides = array<i32>} : memref<2x8x32xf32, #tpu.memory_space<vmem>>, vector<2x1x32xf32>,
    %33 = vector.extract_strided_slice %5 {offsets = [2, 0], sizes = [2, 96], strides = [1, 1]} : vector<16x96xf32> to vector<2x96xf32>
    %34 = vector.extract_strided_slice %33 {offsets = [0, 0], sizes = [2, 64], strides = [1, 1]} : vector<2x96xf32> to vector<2x64xf32>
    %cst_14 = arith.constant dense<0.000000e+00> : vector<2x64xf32>
    %35 = tpu.matmul %29, %6, %cst_14 {dimension_numbers = #tpu.dot_dimension_numbers<[1], [0], [0], [1], [0, 0, 1, 1], [], []>} : vector<2x32xf32>, vector<32x64xf32>, vector<2x64xf32> -> vector<2x64xf32>
    %36 = arith.addf %34, %35 : vector<2x64xf32>
    %37 = arith.negf %36 : vector<2x64xf32>
    %38 = math.exp %37 : vector<2x64xf32>
    %cst_15 = arith.constant 1.000000e+00 : f32
    %39 = vector.broadcast %cst_15 : f32 to vector<2x64xf32>
    %40 = arith.addf %39, %38 : vector<2x64xf32>
    %41 = arith.divf %39, %40 : vector<2x64xf32>
    %42 = vector.extract_strided_slice %41 {offsets = [0, 0], sizes = [2, 32], strides = [1, 1]} : vector<2x64xf32> to vector<2x32xf32>
    %43 = vector.extract_strided_slice %41 {offsets = [0, 32], sizes = [2, 32], strides = [1, 1]} : vector<2x64xf32> to vector<2x32xf32>
    %44 = vector.extract_strided_slice %33 {offsets = [0, 64], sizes = [2, 32], strides = [1, 1]} : vector<2x96xf32> to vector<2x32xf32>
    %45 = arith.mulf %43, %29 : vector<2x32xf32>
    %cst_16 = arith.constant dense<0.000000e+00> : vector<2x32xf32>
    %46 = tpu.matmul %45, %7, %cst_16 {dimension_numbers = #tpu.dot_dimension_numbers<[1], [0], [0], [1], [0, 0, 1, 1], [], []>} : vector<2x32xf32>, vector<32x32xf32>, vector<2x32xf32> -> vector<2x32xf32>
    %47 = arith.addf %44, %46 : vector<2x32xf32>
    %48 = math.tanh %47 : vector<2x32xf32>
    %cst_17 = arith.constant 1.000000e+00 : f32
    %49 = vector.broadcast %cst_17 : f32 to vector<2x32xf32>
    %50 = arith.subf %49, %42 : vector<2x32xf32>
    %51 = arith.mulf %50, %29 : vector<2x32xf32>
    %52 = arith.mulf %42, %48 : vector<2x32xf32>
    %53 = arith.addf %51, %52 : vector<2x32xf32>
    %c0_18 = arith.constant 0 : index
    %c1 = arith.constant 1 : index
    %c0_19 = arith.constant 0 : index
    %54 = vector.load %arg5[%c0_18, %c1, %c0_19] : memref<2x8x32xf32, #tpu.memory_space<vmem>>, vector<2x1x32xf32>
    %55 = vector.shape_cast %54 : vector<2x1x32xf32> to vector<2x32xf32>
    %56 = vector.shape_cast %53 : vector<2x32xf32> to vector<2x1x32xf32>
    tpu.vector_store %arg5[%c0_18, %c1, %c0_19], %56 {strides = array<i32>} : memref<2x8x32xf32, #tpu.memory_space<vmem>>, vector<2x1x32xf32>,
    %57 = vector.extract_strided_slice %5 {offsets = [4, 0], sizes = [2, 96], strides = [1, 1]} : vector<16x96xf32> to vector<2x96xf32>
    %58 = vector.extract_strided_slice %57 {offsets = [0, 0], sizes = [2, 64], strides = [1, 1]} : vector<2x96xf32> to vector<2x64xf32>
    %cst_20 = arith.constant dense<0.000000e+00> : vector<2x64xf32>
    %59 = tpu.matmul %53, %6, %cst_20 {dimension_numbers = #tpu.dot_dimension_numbers<[1], [0], [0], [1], [0, 0, 1, 1], [], []>} : vector<2x32xf32>, vector<32x64xf32>, vector<2x64xf32> -> vector<2x64xf32>
    %60 = arith.addf %58, %59 : vector<2x64xf32>
    %61 = arith.negf %60 : vector<2x64xf32>
    %62 = math.exp %61 : vector<2x64xf32>
    %cst_21 = arith.constant 1.000000e+00 : f32
    %63 = vector.broadcast %cst_21 : f32 to vector<2x64xf32>
    %64 = arith.addf %63, %62 : vector<2x64xf32>
    %65 = arith.divf %63, %64 : vector<2x64xf32>
    %66 = vector.extract_strided_slice %65 {offsets = [0, 0], sizes = [2, 32], strides = [1, 1]} : vector<2x64xf32> to vector<2x32xf32>
    %67 = vector.extract_strided_slice %65 {offsets = [0, 32], sizes = [2, 32], strides = [1, 1]} : vector<2x64xf32> to vector<2x32xf32>
    %68 = vector.extract_strided_slice %57 {offsets = [0, 64], sizes = [2, 32], strides = [1, 1]} : vector<2x96xf32> to vector<2x32xf32>
    %69 = arith.mulf %67, %53 : vector<2x32xf32>
    %cst_22 = arith.constant dense<0.000000e+00> : vector<2x32xf32>
    %70 = tpu.matmul %69, %7, %cst_22 {dimension_numbers = #tpu.dot_dimension_numbers<[1], [0], [0], [1], [0, 0, 1, 1], [], []>} : vector<2x32xf32>, vector<32x32xf32>, vector<2x32xf32> -> vector<2x32xf32>
    %71 = arith.addf %68, %70 : vector<2x32xf32>
    %72 = math.tanh %71 : vector<2x32xf32>
    %cst_23 = arith.constant 1.000000e+00 : f32
    %73 = vector.broadcast %cst_23 : f32 to vector<2x32xf32>
    %74 = arith.subf %73, %66 : vector<2x32xf32>
    %75 = arith.mulf %74, %53 : vector<2x32xf32>
    %76 = arith.mulf %66, %72 : vector<2x32xf32>
    %77 = arith.addf %75, %76 : vector<2x32xf32>
    %c0_24 = arith.constant 0 : index
    %c2 = arith.constant 2 : index
    %c0_25 = arith.constant 0 : index
    %78 = vector.load %arg5[%c0_24, %c2, %c0_25] : memref<2x8x32xf32, #tpu.memory_space<vmem>>, vector<2x1x32xf32>
    %79 = vector.shape_cast %78 : vector<2x1x32xf32> to vector<2x32xf32>
    %80 = vector.shape_cast %77 : vector<2x32xf32> to vector<2x1x32xf32>
    tpu.vector_store %arg5[%c0_24, %c2, %c0_25], %80 {strides = array<i32>} : memref<2x8x32xf32, #tpu.memory_space<vmem>>, vector<2x1x32xf32>,
    %81 = vector.extract_strided_slice %5 {offsets = [6, 0], sizes = [2, 96], strides = [1, 1]} : vector<16x96xf32> to vector<2x96xf32>
    %82 = vector.extract_strided_slice %81 {offsets = [0, 0], sizes = [2, 64], strides = [1, 1]} : vector<2x96xf32> to vector<2x64xf32>
    %cst_26 = arith.constant dense<0.000000e+00> : vector<2x64xf32>
    %83 = tpu.matmul %77, %6, %cst_26 {dimension_numbers = #tpu.dot_dimension_numbers<[1], [0], [0], [1], [0, 0, 1, 1], [], []>} : vector<2x32xf32>, vector<32x64xf32>, vector<2x64xf32> -> vector<2x64xf32>
    %84 = arith.addf %82, %83 : vector<2x64xf32>
    %85 = arith.negf %84 : vector<2x64xf32>
    %86 = math.exp %85 : vector<2x64xf32>
    %cst_27 = arith.constant 1.000000e+00 : f32
    %87 = vector.broadcast %cst_27 : f32 to vector<2x64xf32>
    %88 = arith.addf %87, %86 : vector<2x64xf32>
    %89 = arith.divf %87, %88 : vector<2x64xf32>
    %90 = vector.extract_strided_slice %89 {offsets = [0, 0], sizes = [2, 32], strides = [1, 1]} : vector<2x64xf32> to vector<2x32xf32>
    %91 = vector.extract_strided_slice %89 {offsets = [0, 32], sizes = [2, 32], strides = [1, 1]} : vector<2x64xf32> to vector<2x32xf32>
    %92 = vector.extract_strided_slice %81 {offsets = [0, 64], sizes = [2, 32], strides = [1, 1]} : vector<2x96xf32> to vector<2x32xf32>
    %93 = arith.mulf %91, %77 : vector<2x32xf32>
    %cst_28 = arith.constant dense<0.000000e+00> : vector<2x32xf32>
    %94 = tpu.matmul %93, %7, %cst_28 {dimension_numbers = #tpu.dot_dimension_numbers<[1], [0], [0], [1], [0, 0, 1, 1], [], []>} : vector<2x32xf32>, vector<32x32xf32>, vector<2x32xf32> -> vector<2x32xf32>
    %95 = arith.addf %92, %94 : vector<2x32xf32>
    %96 = math.tanh %95 : vector<2x32xf32>
    %cst_29 = arith.constant 1.000000e+00 : f32
    %97 = vector.broadcast %cst_29 : f32 to vector<2x32xf32>
    %98 = arith.subf %97, %90 : vector<2x32xf32>
    %99 = arith.mulf %98, %77 : vector<2x32xf32>
    %100 = arith.mulf %90, %96 : vector<2x32xf32>
    %101 = arith.addf %99, %100 : vector<2x32xf32>
    %c0_30 = arith.constant 0 : index
    %c3 = arith.constant 3 : index
    %c0_31 = arith.constant 0 : index
    %102 = vector.load %arg5[%c0_30, %c3, %c0_31] : memref<2x8x32xf32, #tpu.memory_space<vmem>>, vector<2x1x32xf32>
    %103 = vector.shape_cast %102 : vector<2x1x32xf32> to vector<2x32xf32>
    %104 = vector.shape_cast %101 : vector<2x32xf32> to vector<2x1x32xf32>
    tpu.vector_store %arg5[%c0_30, %c3, %c0_31], %104 {strides = array<i32>} : memref<2x8x32xf32, #tpu.memory_space<vmem>>, vector<2x1x32xf32>,
    %105 = vector.extract_strided_slice %5 {offsets = [8, 0], sizes = [2, 96], strides = [1, 1]} : vector<16x96xf32> to vector<2x96xf32>
    %106 = vector.extract_strided_slice %105 {offsets = [0, 0], sizes = [2, 64], strides = [1, 1]} : vector<2x96xf32> to vector<2x64xf32>
    %cst_32 = arith.constant dense<0.000000e+00> : vector<2x64xf32>
    %107 = tpu.matmul %101, %6, %cst_32 {dimension_numbers = #tpu.dot_dimension_numbers<[1], [0], [0], [1], [0, 0, 1, 1], [], []>} : vector<2x32xf32>, vector<32x64xf32>, vector<2x64xf32> -> vector<2x64xf32>
    %108 = arith.addf %106, %107 : vector<2x64xf32>
    %109 = arith.negf %108 : vector<2x64xf32>
    %110 = math.exp %109 : vector<2x64xf32>
    %cst_33 = arith.constant 1.000000e+00 : f32
    %111 = vector.broadcast %cst_33 : f32 to vector<2x64xf32>
    %112 = arith.addf %111, %110 : vector<2x64xf32>
    %113 = arith.divf %111, %112 : vector<2x64xf32>
    %114 = vector.extract_strided_slice %113 {offsets = [0, 0], sizes = [2, 32], strides = [1, 1]} : vector<2x64xf32> to vector<2x32xf32>
    %115 = vector.extract_strided_slice %113 {offsets = [0, 32], sizes = [2, 32], strides = [1, 1]} : vector<2x64xf32> to vector<2x32xf32>
    %116 = vector.extract_strided_slice %105 {offsets = [0, 64], sizes = [2, 32], strides = [1, 1]} : vector<2x96xf32> to vector<2x32xf32>
    %117 = arith.mulf %115, %101 : vector<2x32xf32>
    %cst_34 = arith.constant dense<0.000000e+00> : vector<2x32xf32>
    %118 = tpu.matmul %117, %7, %cst_34 {dimension_numbers = #tpu.dot_dimension_numbers<[1], [0], [0], [1], [0, 0, 1, 1], [], []>} : vector<2x32xf32>, vector<32x32xf32>, vector<2x32xf32> -> vector<2x32xf32>
    %119 = arith.addf %116, %118 : vector<2x32xf32>
    %120 = math.tanh %119 : vector<2x32xf32>
    %cst_35 = arith.constant 1.000000e+00 : f32
    %121 = vector.broadcast %cst_35 : f32 to vector<2x32xf32>
    %122 = arith.subf %121, %114 : vector<2x32xf32>
    %123 = arith.mulf %122, %101 : vector<2x32xf32>
    %124 = arith.mulf %114, %120 : vector<2x32xf32>
    %125 = arith.addf %123, %124 : vector<2x32xf32>
    %c0_36 = arith.constant 0 : index
    %c4 = arith.constant 4 : index
    %c0_37 = arith.constant 0 : index
    %126 = vector.load %arg5[%c0_36, %c4, %c0_37] : memref<2x8x32xf32, #tpu.memory_space<vmem>>, vector<2x1x32xf32>
    %127 = vector.shape_cast %126 : vector<2x1x32xf32> to vector<2x32xf32>
    %128 = vector.shape_cast %125 : vector<2x32xf32> to vector<2x1x32xf32>
    tpu.vector_store %arg5[%c0_36, %c4, %c0_37], %128 {strides = array<i32>} : memref<2x8x32xf32, #tpu.memory_space<vmem>>, vector<2x1x32xf32>,
    %129 = vector.extract_strided_slice %5 {offsets = [10, 0], sizes = [2, 96], strides = [1, 1]} : vector<16x96xf32> to vector<2x96xf32>
    %130 = vector.extract_strided_slice %129 {offsets = [0, 0], sizes = [2, 64], strides = [1, 1]} : vector<2x96xf32> to vector<2x64xf32>
    %cst_38 = arith.constant dense<0.000000e+00> : vector<2x64xf32>
    %131 = tpu.matmul %125, %6, %cst_38 {dimension_numbers = #tpu.dot_dimension_numbers<[1], [0], [0], [1], [0, 0, 1, 1], [], []>} : vector<2x32xf32>, vector<32x64xf32>, vector<2x64xf32> -> vector<2x64xf32>
    %132 = arith.addf %130, %131 : vector<2x64xf32>
    %133 = arith.negf %132 : vector<2x64xf32>
    %134 = math.exp %133 : vector<2x64xf32>
    %cst_39 = arith.constant 1.000000e+00 : f32
    %135 = vector.broadcast %cst_39 : f32 to vector<2x64xf32>
    %136 = arith.addf %135, %134 : vector<2x64xf32>
    %137 = arith.divf %135, %136 : vector<2x64xf32>
    %138 = vector.extract_strided_slice %137 {offsets = [0, 0], sizes = [2, 32], strides = [1, 1]} : vector<2x64xf32> to vector<2x32xf32>
    %139 = vector.extract_strided_slice %137 {offsets = [0, 32], sizes = [2, 32], strides = [1, 1]} : vector<2x64xf32> to vector<2x32xf32>
    %140 = vector.extract_strided_slice %129 {offsets = [0, 64], sizes = [2, 32], strides = [1, 1]} : vector<2x96xf32> to vector<2x32xf32>
    %141 = arith.mulf %139, %125 : vector<2x32xf32>
    %cst_40 = arith.constant dense<0.000000e+00> : vector<2x32xf32>
    %142 = tpu.matmul %141, %7, %cst_40 {dimension_numbers = #tpu.dot_dimension_numbers<[1], [0], [0], [1], [0, 0, 1, 1], [], []>} : vector<2x32xf32>, vector<32x32xf32>, vector<2x32xf32> -> vector<2x32xf32>
    %143 = arith.addf %140, %142 : vector<2x32xf32>
    %144 = math.tanh %143 : vector<2x32xf32>
    %cst_41 = arith.constant 1.000000e+00 : f32
    %145 = vector.broadcast %cst_41 : f32 to vector<2x32xf32>
    %146 = arith.subf %145, %138 : vector<2x32xf32>
    %147 = arith.mulf %146, %125 : vector<2x32xf32>
    %148 = arith.mulf %138, %144 : vector<2x32xf32>
    %149 = arith.addf %147, %148 : vector<2x32xf32>
    %c0_42 = arith.constant 0 : index
    %c5 = arith.constant 5 : index
    %c0_43 = arith.constant 0 : index
    %150 = vector.load %arg5[%c0_42, %c5, %c0_43] : memref<2x8x32xf32, #tpu.memory_space<vmem>>, vector<2x1x32xf32>
    %151 = vector.shape_cast %150 : vector<2x1x32xf32> to vector<2x32xf32>
    %152 = vector.shape_cast %149 : vector<2x32xf32> to vector<2x1x32xf32>
    tpu.vector_store %arg5[%c0_42, %c5, %c0_43], %152 {strides = array<i32>} : memref<2x8x32xf32, #tpu.memory_space<vmem>>, vector<2x1x32xf32>,
    %153 = vector.extract_strided_slice %5 {offsets = [12, 0], sizes = [2, 96], strides = [1, 1]} : vector<16x96xf32> to vector<2x96xf32>
    %154 = vector.extract_strided_slice %153 {offsets = [0, 0], sizes = [2, 64], strides = [1, 1]} : vector<2x96xf32> to vector<2x64xf32>
    %cst_44 = arith.constant dense<0.000000e+00> : vector<2x64xf32>
    %155 = tpu.matmul %149, %6, %cst_44 {dimension_numbers = #tpu.dot_dimension_numbers<[1], [0], [0], [1], [0, 0, 1, 1], [], []>} : vector<2x32xf32>, vector<32x64xf32>, vector<2x64xf32> -> vector<2x64xf32>
    %156 = arith.addf %154, %155 : vector<2x64xf32>
    %157 = arith.negf %156 : vector<2x64xf32>
    %158 = math.exp %157 : vector<2x64xf32>
    %cst_45 = arith.constant 1.000000e+00 : f32
    %159 = vector.broadcast %cst_45 : f32 to vector<2x64xf32>
    %160 = arith.addf %159, %158 : vector<2x64xf32>
    %161 = arith.divf %159, %160 : vector<2x64xf32>
    %162 = vector.extract_strided_slice %161 {offsets = [0, 0], sizes = [2, 32], strides = [1, 1]} : vector<2x64xf32> to vector<2x32xf32>
    %163 = vector.extract_strided_slice %161 {offsets = [0, 32], sizes = [2, 32], strides = [1, 1]} : vector<2x64xf32> to vector<2x32xf32>
    %164 = vector.extract_strided_slice %153 {offsets = [0, 64], sizes = [2, 32], strides = [1, 1]} : vector<2x96xf32> to vector<2x32xf32>
    %165 = arith.mulf %163, %149 : vector<2x32xf32>
    %cst_46 = arith.constant dense<0.000000e+00> : vector<2x32xf32>
    %166 = tpu.matmul %165, %7, %cst_46 {dimension_numbers = #tpu.dot_dimension_numbers<[1], [0], [0], [1], [0, 0, 1, 1], [], []>} : vector<2x32xf32>, vector<32x32xf32>, vector<2x32xf32> -> vector<2x32xf32>
    %167 = arith.addf %164, %166 : vector<2x32xf32>
    %168 = math.tanh %167 : vector<2x32xf32>
    %cst_47 = arith.constant 1.000000e+00 : f32
    %169 = vector.broadcast %cst_47 : f32 to vector<2x32xf32>
    %170 = arith.subf %169, %162 : vector<2x32xf32>
    %171 = arith.mulf %170, %149 : vector<2x32xf32>
    %172 = arith.mulf %162, %168 : vector<2x32xf32>
    %173 = arith.addf %171, %172 : vector<2x32xf32>
    %c0_48 = arith.constant 0 : index
    %c6 = arith.constant 6 : index
    %c0_49 = arith.constant 0 : index
    %174 = vector.load %arg5[%c0_48, %c6, %c0_49] : memref<2x8x32xf32, #tpu.memory_space<vmem>>, vector<2x1x32xf32>
    %175 = vector.shape_cast %174 : vector<2x1x32xf32> to vector<2x32xf32>
    %176 = vector.shape_cast %173 : vector<2x32xf32> to vector<2x1x32xf32>
    tpu.vector_store %arg5[%c0_48, %c6, %c0_49], %176 {strides = array<i32>} : memref<2x8x32xf32, #tpu.memory_space<vmem>>, vector<2x1x32xf32>,
    %177 = vector.extract_strided_slice %5 {offsets = [14, 0], sizes = [2, 96], strides = [1, 1]} : vector<16x96xf32> to vector<2x96xf32>
    %178 = vector.extract_strided_slice %177 {offsets = [0, 0], sizes = [2, 64], strides = [1, 1]} : vector<2x96xf32> to vector<2x64xf32>
    %cst_50 = arith.constant dense<0.000000e+00> : vector<2x64xf32>
    %179 = tpu.matmul %173, %6, %cst_50 {dimension_numbers = #tpu.dot_dimension_numbers<[1], [0], [0], [1], [0, 0, 1, 1], [], []>} : vector<2x32xf32>, vector<32x64xf32>, vector<2x64xf32> -> vector<2x64xf32>
    %180 = arith.addf %178, %179 : vector<2x64xf32>
    %181 = arith.negf %180 : vector<2x64xf32>
    %182 = math.exp %181 : vector<2x64xf32>
    %cst_51 = arith.constant 1.000000e+00 : f32
    %183 = vector.broadcast %cst_51 : f32 to vector<2x64xf32>
    %184 = arith.addf %183, %182 : vector<2x64xf32>
    %185 = arith.divf %183, %184 : vector<2x64xf32>
    %186 = vector.extract_strided_slice %185 {offsets = [0, 0], sizes = [2, 32], strides = [1, 1]} : vector<2x64xf32> to vector<2x32xf32>
    %187 = vector.extract_strided_slice %185 {offsets = [0, 32], sizes = [2, 32], strides = [1, 1]} : vector<2x64xf32> to vector<2x32xf32>
    %188 = vector.extract_strided_slice %177 {offsets = [0, 64], sizes = [2, 32], strides = [1, 1]} : vector<2x96xf32> to vector<2x32xf32>
    %189 = arith.mulf %187, %173 : vector<2x32xf32>
    %cst_52 = arith.constant dense<0.000000e+00> : vector<2x32xf32>
    %190 = tpu.matmul %189, %7, %cst_52 {dimension_numbers = #tpu.dot_dimension_numbers<[1], [0], [0], [1], [0, 0, 1, 1], [], []>} : vector<2x32xf32>, vector<32x32xf32>, vector<2x32xf32> -> vector<2x32xf32>
    %191 = arith.addf %188, %190 : vector<2x32xf32>
    %192 = math.tanh %191 : vector<2x32xf32>
    %cst_53 = arith.constant 1.000000e+00 : f32
    %193 = vector.broadcast %cst_53 : f32 to vector<2x32xf32>
    %194 = arith.subf %193, %186 : vector<2x32xf32>
    %195 = arith.mulf %194, %173 : vector<2x32xf32>
    %196 = arith.mulf %186, %192 : vector<2x32xf32>
    %197 = arith.addf %195, %196 : vector<2x32xf32>
    %c0_54 = arith.constant 0 : index
    %c7 = arith.constant 7 : index
    %c0_55 = arith.constant 0 : index
    %198 = vector.load %arg5[%c0_54, %c7, %c0_55] : memref<2x8x32xf32, #tpu.memory_space<vmem>>, vector<2x1x32xf32>
    %199 = vector.shape_cast %198 : vector<2x1x32xf32> to vector<2x32xf32>
    %200 = vector.shape_cast %197 : vector<2x32xf32> to vector<2x1x32xf32>
    tpu.vector_store %arg5[%c0_54, %c7, %c0_55], %200 {strides = array<i32>} : memref<2x8x32xf32, #tpu.memory_space<vmem>>, vector<2x1x32xf32>,
    %c0_56 = arith.constant 0 : index
    %c0_57 = arith.constant 0 : index
    %c0_58 = arith.constant 0 : index
    %201 = vector.load %arg5[%c0_56, %c0_57, %c0_58] : memref<2x8x32xf32, #tpu.memory_space<vmem>>, vector<2x8x32xf32>
    %202 = vector.shape_cast %201 : vector<2x8x32xf32> to vector<16x32xf32>
    %c0_59 = arith.constant 0 : index
    %c96 = arith.constant 96 : index
    %203 = vector.load %arg3[%c0_59, %c96] : memref<248x128xf32, #tpu.memory_space<vmem>>, vector<32x32xf32>
    %cst_60 = arith.constant dense<0.000000e+00> : vector<16x32xf32>
    %204 = tpu.matmul %202, %203, %cst_60 {dimension_numbers = #tpu.dot_dimension_numbers<[1], [0], [0], [1], [0, 0, 1, 1], [], []>} : vector<16x32xf32>, vector<32x32xf32>, vector<16x32xf32> -> vector<16x32xf32>
    %c240_61 = arith.constant 240 : index
    %c96_62 = arith.constant 96 : index
    %205 = vector.load %arg3[%c240_61, %c96_62] : memref<248x128xf32, #tpu.memory_space<vmem>>, vector<1x32xf32>
    %206 = vector.broadcast %205 : vector<1x32xf32> to vector<16x32xf32>
    %207 = arith.addf %204, %206 : vector<16x32xf32>
    %cst_63 = arith.constant 0.000000e+00 : f32
    %208 = vector.broadcast %cst_63 : f32 to vector<16x32xf32>
    %209 = arith.maximumf %207, %208 : vector<16x32xf32>
    %c176 = arith.constant 176 : index
    %c112 = arith.constant 112 : index
    %210 = vector.load %arg3[%c176, %c112] : memref<248x128xf32, #tpu.memory_space<vmem>>, vector<32x2xf32>
    %cst_64 = arith.constant dense<0.000000e+00> : vector<16x2xf32>
    %211 = tpu.matmul %209, %210, %cst_64 {dimension_numbers = #tpu.dot_dimension_numbers<[1], [0], [0], [1], [0, 0, 1, 1], [], []>} : vector<16x32xf32>, vector<32x2xf32>, vector<16x2xf32> -> vector<16x2xf32>
    %c242 = arith.constant 242 : index
    %c112_65 = arith.constant 112 : index
    %212 = vector.load %arg3[%c242, %c112_65] : memref<248x128xf32, #tpu.memory_space<vmem>>, vector<1x2xf32>
    %213 = vector.broadcast %212 : vector<1x2xf32> to vector<16x2xf32>
    %214 = arith.addf %211, %213 : vector<16x2xf32>
    %215 = vector.shape_cast %214 : vector<16x2xf32> to vector<2x8x2xf32>
    %216 = tpu.iota {dimensions = array<i32: 1>} : vector<2x8x1xi32>
    %217 = tpu.iota {dimensions = array<i32: 0>} : vector<2x8x1xi32>
    %c0_i32 = arith.constant 0 : i32
    %218 = vector.broadcast %c0_i32 : i32 to vector<2x8x1xi32>
    %c0_i32_66 = arith.constant 0 : i32
    %219 = vector.broadcast %c0_i32_66 : i32 to vector<2x8x1xi32>
    %220 = arith.cmpi eq, %217, %219 : vector<2x8x1xi32>
    %c0_67 = arith.constant 0 : index
    %221 = memref.load %arg0[%c0_67] : memref<2xi32, #tpu.memory_space<smem>>
    %222 = vector.broadcast %221 : i32 to vector<2x8x1xi32>
    %223 = arith.select %220, %222, %218 : vector<2x8x1xi1>, vector<2x8x1xi32>
    %c1_i32 = arith.constant 1 : i32
    %224 = vector.broadcast %c1_i32 : i32 to vector<2x8x1xi32>
    %225 = arith.cmpi eq, %217, %224 : vector<2x8x1xi32>
    %c1_68 = arith.constant 1 : index
    %226 = memref.load %arg0[%c1_68] : memref<2xi32, #tpu.memory_space<smem>>
    %227 = vector.broadcast %226 : i32 to vector<2x8x1xi32>
    %228 = arith.select %225, %227, %223 : vector<2x8x1xi1>, vector<2x8x1xi32>
    %229 = arith.cmpi slt, %216, %228 : vector<2x8x1xi32>
    %cst_69 = arith.constant -1.000000e+09 : f32
    %230 = vector.shape_cast %229 : vector<2x8x1xi1> to vector<2x8x1xi1>
    %231 = vector.broadcast %230 : vector<2x8x1xi1> to vector<2x8x2xi1>
    %232 = vector.broadcast %cst_69 : f32 to vector<2x8x2xf32>
    %233 = arith.select %231, %215, %232 : vector<2x8x2xi1>, vector<2x8x2xf32>
    %cst_70 = arith.constant dense<0xFF800000> : vector<2x2xf32>
    %234 = vector.multi_reduction <maximumf>, %233, %cst_70 [1] : vector<2x8x2xf32> to vector<2x2xf32>
    %235 = vector.shape_cast %234 : vector<2x2xf32> to vector<2x1x2xf32>
    %236 = vector.broadcast %235 : vector<2x1x2xf32> to vector<2x8x2xf32>
    %237 = arith.subf %233, %236 : vector<2x8x2xf32>
    %238 = math.exp %237 : vector<2x8x2xf32>
    %cst_71 = arith.constant dense<0.000000e+00> : vector<2x2xf32>
    %239 = vector.multi_reduction <add>, %238, %cst_71 [1] : vector<2x8x2xf32> to vector<2x2xf32>
    %240 = vector.shape_cast %239 : vector<2x2xf32> to vector<2x1x2xf32>
    %cst_72 = arith.constant 1.000000e-30 : f32
    %241 = vector.broadcast %cst_72 : f32 to vector<2x1x2xf32>
    %242 = arith.maximumf %240, %241 : vector<2x1x2xf32>
    %243 = tpu.reciprocal %242 {approx = true} : vector<2x1x2xf32> -> vector<2x1x2xf32>
    %244 = vector.broadcast %243 : vector<2x1x2xf32> to vector<2x8x2xf32>
    %245 = arith.mulf %238, %244 : vector<2x8x2xf32>
    %246 = vector.extract_strided_slice %245 {offsets = [0, 0, 0], sizes = [2, 8, 1], strides = [1, 1, 1]} : vector<2x8x2xf32> to vector<2x8x1xf32>
    %247 = vector.broadcast %246 : vector<2x8x1xf32> to vector<2x8x32xf32>
    %248 = arith.mulf %247, %201 : vector<2x8x32xf32>
    %cst_73 = arith.constant dense<0.000000e+00> : vector<2x32xf32>
    %249 = vector.multi_reduction <add>, %248, %cst_73 [1] : vector<2x8x32xf32> to vector<2x32xf32>
    %250 = vector.extract_strided_slice %245 {offsets = [0, 0, 1], sizes = [2, 8, 1], strides = [1, 1, 1]} : vector<2x8x2xf32> to vector<2x8x1xf32>
    %251 = vector.broadcast %250 : vector<2x8x1xf32> to vector<2x8x32xf32>
    %252 = arith.mulf %251, %201 : vector<2x8x32xf32>
    %cst_74 = arith.constant dense<0.000000e+00> : vector<2x32xf32>
    %253 = vector.multi_reduction <add>, %252, %cst_74 [1] : vector<2x8x32xf32> to vector<2x32xf32>
    %254 = tpu.concatenate %249, %253 in 1 : vector<2x32xf32>, vector<2x32xf32> -> vector<2x64xf32>
    %c0_75 = arith.constant 0 : index
    %c0_76 = arith.constant 0 : index
    %255 = vector.load %arg2[%c0_75, %c0_76] : memref<16x32xf32, #tpu.memory_space<vmem>>, vector<16x32xf32>
    %256 = vector.shape_cast %255 : vector<16x32xf32> to vector<2x8x32xf32>
    %c48 = arith.constant 48 : index
    %c64_77 = arith.constant 64 : index
    %257 = vector.load %arg3[%c48, %c64_77] : memref<248x128xf32, #tpu.memory_space<vmem>>, vector<64x64xf32>
    %cst_78 = arith.constant dense<0.000000e+00> : vector<2x64xf32>
    %258 = tpu.matmul %254, %257, %cst_78 {dimension_numbers = #tpu.dot_dimension_numbers<[1], [0], [0], [1], [0, 0, 1, 1], [], []>} : vector<2x64xf32>, vector<64x64xf32>, vector<2x64xf32> -> vector<2x64xf32>
    %c176_79 = arith.constant 176 : index
    %c48_80 = arith.constant 48 : index
    %259 = vector.load %arg3[%c176_79, %c48_80] : memref<248x128xf32, #tpu.memory_space<vmem>>, vector<32x64xf32>
    %cst_81 = arith.constant dense<0.000000e+00> : vector<16x64xf32>
    %260 = tpu.matmul %255, %259, %cst_81 {dimension_numbers = #tpu.dot_dimension_numbers<[1], [0], [0], [1], [0, 0, 1, 1], [], []>} : vector<16x32xf32>, vector<32x64xf32>, vector<16x64xf32> -> vector<16x64xf32>
    %261 = vector.shape_cast %260 : vector<16x64xf32> to vector<2x8x64xf32>
    %262 = vector.shape_cast %258 : vector<2x64xf32> to vector<2x1x64xf32>
    %263 = vector.broadcast %262 : vector<2x1x64xf32> to vector<2x8x64xf32>
    %264 = arith.addf %261, %263 : vector<2x8x64xf32>
    %c241 = arith.constant 241 : index
    %c0_82 = arith.constant 0 : index
    %265 = vector.load %arg3[%c241, %c0_82] : memref<248x128xf32, #tpu.memory_space<vmem>>, vector<1x64xf32>
    %266 = vector.shape_cast %265 : vector<1x64xf32> to vector<1x1x64xf32>
    %267 = vector.broadcast %266 : vector<1x1x64xf32> to vector<2x8x64xf32>
    %268 = arith.addf %264, %267 : vector<2x8x64xf32>
    %cst_83 = arith.constant 0.000000e+00 : f32
    %269 = vector.broadcast %cst_83 : f32 to vector<2x8x64xf32>
    %270 = arith.maximumf %268, %269 : vector<2x8x64xf32>
    %271 = vector.shape_cast %270 : vector<2x8x64xf32> to vector<16x64xf32>
    %c112_84 = arith.constant 112 : index
    %c64_85 = arith.constant 64 : index
    %272 = vector.load %arg3[%c112_84, %c64_85] : memref<248x128xf32, #tpu.memory_space<vmem>>, vector<64x64xf32>
    %cst_86 = arith.constant dense<0.000000e+00> : vector<16x64xf32>
    %273 = tpu.matmul %271, %272, %cst_86 {dimension_numbers = #tpu.dot_dimension_numbers<[1], [0], [0], [1], [0, 0, 1, 1], [], []>} : vector<16x64xf32>, vector<64x64xf32>, vector<16x64xf32> -> vector<16x64xf32>
    %c241_87 = arith.constant 241 : index
    %c64_88 = arith.constant 64 : index
    %274 = vector.load %arg3[%c241_87, %c64_88] : memref<248x128xf32, #tpu.memory_space<vmem>>, vector<1x64xf32>
    %275 = vector.broadcast %274 : vector<1x64xf32> to vector<16x64xf32>
    %276 = arith.addf %273, %275 : vector<16x64xf32>
    %c176_89 = arith.constant 176 : index
    %c0_90 = arith.constant 0 : index
    %277 = vector.load %arg3[%c176_89, %c0_90] : memref<248x128xf32, #tpu.memory_space<vmem>>, vector<64x32xf32>
    %cst_91 = arith.constant dense<0.000000e+00> : vector<16x32xf32>
    %278 = tpu.matmul %276, %277, %cst_91 {dimension_numbers = #tpu.dot_dimension_numbers<[1], [0], [0], [1], [0, 0, 1, 1], [], []>} : vector<16x64xf32>, vector<64x32xf32>, vector<16x32xf32> -> vector<16x32xf32>
    %c242_92 = arith.constant 242 : index
    %c64_93 = arith.constant 64 : index
    %279 = vector.load %arg3[%c242_92, %c64_93] : memref<248x128xf32, #tpu.memory_space<vmem>>, vector<1x32xf32>
    %280 = vector.broadcast %279 : vector<1x32xf32> to vector<16x32xf32>
    %281 = arith.addf %278, %280 : vector<16x32xf32>
    %cst_94 = arith.constant 0.000000e+00 : f32
    %282 = vector.broadcast %cst_94 : f32 to vector<16x32xf32>
    %283 = arith.maximumf %281, %282 : vector<16x32xf32>
    %c176_95 = arith.constant 176 : index
    %c120 = arith.constant 120 : index
    %284 = vector.load %arg3[%c176_95, %c120] : memref<248x128xf32, #tpu.memory_space<vmem>>, vector<32x2xf32>
    %cst_96 = arith.constant dense<0.000000e+00> : vector<16x2xf32>
    %285 = tpu.matmul %283, %284, %cst_96 {dimension_numbers = #tpu.dot_dimension_numbers<[1], [0], [0], [1], [0, 0, 1, 1], [], []>} : vector<16x32xf32>, vector<32x2xf32>, vector<16x2xf32> -> vector<16x2xf32>
    %c242_97 = arith.constant 242 : index
    %c120_98 = arith.constant 120 : index
    %286 = vector.load %arg3[%c242_97, %c120_98] : memref<248x128xf32, #tpu.memory_space<vmem>>, vector<1x2xf32>
    %287 = vector.broadcast %286 : vector<1x2xf32> to vector<16x2xf32>
    %288 = arith.addf %285, %287 : vector<16x2xf32>
    %289 = vector.shape_cast %288 : vector<16x2xf32> to vector<2x8x2xf32>
    %cst_99 = arith.constant dense<0xFF800000> : vector<2x2xf32>
    %290 = vector.multi_reduction <maximumf>, %289, %cst_99 [1] : vector<2x8x2xf32> to vector<2x2xf32>
    %291 = vector.shape_cast %290 : vector<2x2xf32> to vector<2x1x2xf32>
    %292 = vector.broadcast %291 : vector<2x1x2xf32> to vector<2x8x2xf32>
    %293 = arith.subf %289, %292 : vector<2x8x2xf32>
    %294 = math.exp %293 : vector<2x8x2xf32>
    %cst_100 = arith.constant dense<0.000000e+00> : vector<2x2xf32>
    %295 = vector.multi_reduction <add>, %294, %cst_100 [1] : vector<2x8x2xf32> to vector<2x2xf32>
    %296 = vector.shape_cast %295 : vector<2x2xf32> to vector<2x1x2xf32>
    %cst_101 = arith.constant 1.000000e-30 : f32
    %297 = vector.broadcast %cst_101 : f32 to vector<2x1x2xf32>
    %298 = arith.maximumf %296, %297 : vector<2x1x2xf32>
    %299 = tpu.reciprocal %298 {approx = true} : vector<2x1x2xf32> -> vector<2x1x2xf32>
    %300 = vector.broadcast %299 : vector<2x1x2xf32> to vector<2x8x2xf32>
    %301 = arith.mulf %294, %300 : vector<2x8x2xf32>
    %302 = vector.extract_strided_slice %301 {offsets = [0, 0, 0], sizes = [2, 8, 1], strides = [1, 1, 1]} : vector<2x8x2xf32> to vector<2x8x1xf32>
    %303 = vector.broadcast %302 : vector<2x8x1xf32> to vector<2x8x32xf32>
    %304 = arith.mulf %303, %256 : vector<2x8x32xf32>
    %cst_102 = arith.constant dense<0.000000e+00> : vector<2x32xf32>
    %305 = vector.multi_reduction <add>, %304, %cst_102 [1] : vector<2x8x32xf32> to vector<2x32xf32>
    %306 = vector.extract_strided_slice %301 {offsets = [0, 0, 1], sizes = [2, 8, 1], strides = [1, 1, 1]} : vector<2x8x2xf32> to vector<2x8x1xf32>
    %307 = vector.broadcast %306 : vector<2x8x1xf32> to vector<2x8x32xf32>
    %308 = arith.mulf %307, %256 : vector<2x8x32xf32>
    %cst_103 = arith.constant dense<0.000000e+00> : vector<2x32xf32>
    %309 = vector.multi_reduction <add>, %308, %cst_103 [1] : vector<2x8x32xf32> to vector<2x32xf32>
    %310 = tpu.concatenate %305, %309 in 1 : vector<2x32xf32>, vector<2x32xf32> -> vector<2x64xf32>
    %311 = tpu.concatenate %254, %310 in 1 : vector<2x64xf32>, vector<2x64xf32> -> vector<2x128xf32>
    %c48_104 = arith.constant 48 : index
    %c0_105 = arith.constant 0 : index
    %312 = vector.load %arg3[%c48_104, %c0_105] : memref<248x128xf32, #tpu.memory_space<vmem>>, vector<128x64xf32>
    %cst_106 = arith.constant dense<0.000000e+00> : vector<2x64xf32>
    %313 = tpu.matmul %311, %312, %cst_106 {dimension_numbers = #tpu.dot_dimension_numbers<[1], [0], [0], [1], [0, 0, 1, 1], [], []>} : vector<2x128xf32>, vector<128x64xf32>, vector<2x64xf32> -> vector<2x64xf32>
    %c242_107 = arith.constant 242 : index
    %c0_108 = arith.constant 0 : index
    %314 = vector.load %arg3[%c242_107, %c0_108] : memref<248x128xf32, #tpu.memory_space<vmem>>, vector<1x64xf32>
    %315 = vector.broadcast %314 : vector<1x64xf32> to vector<2x64xf32>
    %316 = arith.addf %313, %315 : vector<2x64xf32>
    %cst_109 = arith.constant 0.000000e+00 : f32
    %317 = vector.broadcast %cst_109 : f32 to vector<2x64xf32>
    %318 = arith.maximumf %316, %317 : vector<2x64xf32>
    %c176_110 = arith.constant 176 : index
    %c32_111 = arith.constant 32 : index
    %319 = vector.load %arg3[%c176_110, %c32_111] : memref<248x128xf32, #tpu.memory_space<vmem>>, vector<64x16xf32>
    %cst_112 = arith.constant dense<0.000000e+00> : vector<2x16xf32>
    %320 = tpu.matmul %318, %319, %cst_112 {dimension_numbers = #tpu.dot_dimension_numbers<[1], [0], [0], [1], [0, 0, 1, 1], [], []>} : vector<2x64xf32>, vector<64x16xf32>, vector<2x16xf32> -> vector<2x16xf32>
    %c242_113 = arith.constant 242 : index
    %c96_114 = arith.constant 96 : index
    %321 = vector.load %arg3[%c242_113, %c96_114] : memref<248x128xf32, #tpu.memory_space<vmem>>, vector<1x16xf32>
    %322 = vector.broadcast %321 : vector<1x16xf32> to vector<2x16xf32>
    %323 = arith.addf %320, %322 : vector<2x16xf32>
    %cst_115 = arith.constant dense<0xFF800000> : vector<2xf32>
    %324 = vector.multi_reduction <maximumf>, %323, %cst_115 [1] : vector<2x16xf32> to vector<2xf32>
    %325 = vector.shape_cast %324 : vector<2xf32> to vector<2x1xf32>
    %326 = vector.broadcast %325 : vector<2x1xf32> to vector<2x16xf32>
    %327 = arith.subf %323, %326 : vector<2x16xf32>
    %328 = math.exp %327 : vector<2x16xf32>
    %cst_116 = arith.constant dense<0.000000e+00> : vector<2xf32>
    %329 = vector.multi_reduction <add>, %328, %cst_116 [1] : vector<2x16xf32> to vector<2xf32>
    %330 = vector.shape_cast %329 : vector<2xf32> to vector<2x1xf32>
    %331 = math.log %330 : vector<2x1xf32>
    %332 = arith.addf %325, %331 : vector<2x1xf32>
    %333 = vector.broadcast %332 : vector<2x1xf32> to vector<2x16xf32>
    %334 = arith.subf %323, %333 : vector<2x16xf32>
    %c0_117 = arith.constant 0 : index
    %c0_118 = arith.constant 0 : index
    %335 = vector.load %arg4[%c0_117, %c0_118] : memref<2x16xf32, #tpu.memory_space<vmem>>, vector<2x16xf32>
    tpu.vector_store %arg4[%c0_117, %c0_118], %334 {strides = array<i32>} : memref<2x16xf32, #tpu.memory_space<vmem>>, vector<2x16xf32>,
    return
  }
}

</mosaic_0001>

<llo_original>
// kernel: attention_net_forward.1
$region0: #{attention_net_forward.1}
  #allocation0 [shape = 'u32[]', space=smem, size = 0x4, offset = 0x4, fixed_abs, tag = 'smem constant byte address 0x4 - core index']
  #allocation1 [shape = 'u32[72,128]{1,0:T(1,128)}', space=vmem, size = 0x9000, scoped, tag = 'internal scratch']
  #allocation2 [shape = 'f32[2,8,32]{2,1,0:T(8,128)}', space=vmem, size = 0x2000, scoped, tag = 'scratch operand']
  %s0 = inlined_call_operand.vmem [shape: s32[2], index: 0, kind: input, shape index: {}]
  %s1 = inlined_call_operand.vmem [shape: f32[16,16], index: 1, kind: input, shape index: {}]
  %s2 = inlined_call_operand.hbm [shape: f32[16,32], index: 2, kind: input, shape index: {}]
  %s3 = inlined_call_operand.vmem [shape: f32[248,128], index: 3, kind: input, shape index: {}]
  %s4 = inlined_call_operand.hbm [shape: f32[2,16], index: 4, kind: output, shape index: {}]
  %s5 = sld [smem:[#allocation0]]
  $region34: #{attention_net_forward.1} parent=0
    _
  %s7 = ssub.s32 1, %s5
  %s8 = scalar_select 0, %s7, %s5
  $region1: #{attention_net_forward.1} parent=0
    #allocation3 [shape = 'u8[512]{0}', space=smem, size = 0x200, scoped, tag = 'input window, operand 0, single buffered']
    #allocation4 [shape = 's32[1]{0}', space=sflag, size = 0x4, scoped, tag = 'scoped memory for attention_net_forward.1']
    #allocation5 [shape = 's32[1]{0}', space=sflag, size = 0x4, scoped, tag = 'scoped memory for attention_net_forward.1']
    #allocation6 [shape = 's32[1]{0}', space=sflag, size = 0x4, scoped, tag = 'scoped memory for attention_net_forward.1']
    #allocation7 [shape = 'u8[8192]{0}', space=vmem, size = 0x2000, scoped, tag = 'input window, operand 2, single buffered']
    #allocation8 [shape = 'u8[1024]{0}', space=vmem, size = 0x400, scoped, tag = 'output window, operand 0, single buffered']
    %9 = vsyncpa [#allocation6], 0
    %10 = vsyncpa [#allocation4], 0
    %11 = vsyncpa [#allocation5], 0
    // Predicated region
    $region2: #{attention_net_forward.1} parent=1 // pred_check
      _
    $region3: #{attention_net_forward.1} parent=1 // pred_check_branch
      %13 = sbr.rel (0) target = $region5
    $region4: #{attention_net_forward.1} parent=1 // pred_region
      %15 = vsyncadd [#allocation6], 0
      %s17 = sshll.u32 %s0, 4
      %s18 = int_to_ptr.vmem [resolvable:$true] %s17
      %20 = dma.vmem_to_smem %s18, 16, [#allocation3], [#allocation6]
    $region5: #{attention_net_forward.1} parent=1 // pred_fallthru
      _
    // Predicated region
    $region6: #{attention_net_forward.1} parent=1 // pred_check
      _
    $region7: #{attention_net_forward.1} parent=1 // pred_check_branch
      %22 = sbr.rel (0) target = $region9
    $region8: #{attention_net_forward.1} parent=1 // pred_region
      _
    $region9: #{attention_net_forward.1} parent=1 // pred_fallthru
      _
    // Predicated region
    $region10: #{attention_net_forward.1} parent=1 // pred_check
      _
    $region11: #{attention_net_forward.1} parent=1 // pred_check_branch
      %24 = sbr.rel (0) target = $region13
    $region12: #{attention_net_forward.1} parent=1 // pred_region
      %26 = vsyncadd [#allocation4], 0
      %s27 = sshll.u32 %s2, 4
      %s28 = int_to_ptr.hbm [resolvable:$true] %s27
      %s29 = sshll.u32 [#allocation7], 4
      %s30 = int_to_ptr.vmem [resolvable:$true] %s29
      %35 = dma.hbm_to_vmem [thread:$0]  %s28, 256, %s30, [#allocation4], 128, 128, 8
    $region13: #{attention_net_forward.1} parent=1 // pred_fallthru
      _
    // Predicated region
    $region14: #{attention_net_forward.1} parent=1 // pred_check
      _
    $region15: #{attention_net_forward.1} parent=1 // pred_check_branch
      %37 = sbr.rel (0) target = $region17
    $region16: #{attention_net_forward.1} parent=1 // pred_region
      _
    $region17: #{attention_net_forward.1} parent=1 // pred_fallthru
      _
    // Predicated region
    $region18: #{attention_net_forward.1} parent=1 // pred_check
      _
    $region19: #{attention_net_forward.1} parent=1 // pred_check_branch
      %39 = sbr.rel (0) target = $region21
    $region20: #{attention_net_forward.1} parent=1 // pred_region
      %41 = dma.done [#allocation6], 16
    $region21: #{attention_net_forward.1} parent=1 // pred_fallthru
      _
    // Predicated region
    $region22: #{attention_net_forward.1} parent=1 // pred_check
      _
    $region23: #{attention_net_forward.1} parent=1 // pred_check_branch
      %43 = sbr.rel (0) target = $region25
    $region24: #{attention_net_forward.1} parent=1 // pred_region
      %45 = dma.done [#allocation4], 256
    $region25: #{attention_net_forward.1} parent=1 // pred_fallthru
      _
    %46 = sfence
    %v47 = vld [vmem:[%s1] sm:$0xff]
    %v48 = vld [vmem:[%s1 + $0x8] sm:$0xff]
    %v49 = vld [vmem:[%s3 + $0x20] sm:$0xff]
    %v50 = vld [vmem:[%s3 + $0x28] sm:$0xff]
    %v51 = vld [vmem:[%s3 + $0xf0] sm:$0x1]
    %v52 = vperm.slane %v51, 0
    %vm53 = vcmask 130048
    %v55 = vsel %vm53, %v47, 0
    %v58 = vsel %vm53, %v48, 0
    %60 = vmatpush.msra.mxu0 0.0
    %61 = vmatpush.msra.mxu0 0.0
    %62 = vmatpush.msra.mxu0 0.0
    %63 = vmatpush.msra.mxu0 0.0
    %64 = vmatpush.msra.mxu0 0.0
    %65 = vmatpush.msra.mxu0 0.0
    %66 = vmatpush.msra.mxu0 0.0
    %67 = vmatpush.msra.mxu0 0.0
    %68 = vmatpush.msra.mxu0 0.0
    %69 = vmatpush.msra.mxu0 0.0
    %70 = vmatpush.msra.mxu0 0.0
    %71 = vmatpush.msra.mxu0 0.0
    %72 = vmatpush.msra.mxu0 0.0
    %73 = vmatpush.msra.mxu0 0.0
    %74 = vmatpush.msra.mxu0 %v50
    %75 = vmatpush.msra.mxu0 %v49
    %76 = vmatmul.f32.gmra.mxu0 %v55
    %v77 = vpop.f32.mrf.mxu0
    %v78 = vadd.f32 %v52, %v77
    %79 = vmatmul.f32.gmra.mxu0 %v58
    %v80 = vpop.f32.mrf.mxu0
    %v81 = vadd.f32 %v52, %v80
    %82 = vdwg.mxu0
    %v83 = vld [vmem:[%s3] sm:$0xff]
    %v84 = vld [vmem:[%s3 + $0x8] sm:$0xff]
    %v85 = vld [vmem:[%s3 + $0x10] sm:$0xff]
    %v86 = vld [vmem:[%s3 + $0x18] sm:$0xff]
    %vm87 = vcmask 261120
    %v89 = vsel %vm87, 0.0, 0
    %91 = vmatpush.msra.mxu0 0.0
    %92 = vmatpush.msra.mxu0 0.0
    %93 = vmatpush.msra.mxu0 0.0
    %94 = vmatpush.msra.mxu0 0.0
    %95 = vmatpush.msra.mxu0 0.0
    %96 = vmatpush.msra.mxu0 0.0
    %97 = vmatpush.msra.mxu0 0.0
    %98 = vmatpush.msra.mxu0 0.0
    %99 = vmatpush.msra.mxu0 0.0
    %100 = vmatpush.msra.mxu0 0.0
    %101 = vmatpush.msra.mxu0 0.0
    %102 = vmatpush.msra.mxu0 0.0
    %103 = vmatpush.msra.mxu0 %v86
    %104 = vmatpush.msra.mxu0 %v85
    %105 = vmatpush.msra.mxu0 %v84
    %106 = vmatpush.msra.mxu0 %v83
    %107 = vmatmul.f32.gmra.mxu0 %v89
    %v108 = vpop.f32.mrf.mxu0
    %v109 = vadd.f32 0.0, %v108
    %110 = vdwg.mxu0
    %v111 = vadd.f32 %v78, %v109
    %v112 = vxor.u32 %v111, 2147483648
    %v113 = vmul.f32 %v112, 1.442695
    %v114 = vpow.pop %v113
    %v115 = vadd.f32 %v114, 1.0
    %v116 = vrcp.pop %v115
    %v117 = vmul.f32 %v115, %v116
    %v118 = vsub.f32 1.0, %v117
    %v119 = vmul.f32 %v116, %v118
    %v120 = vadd.f32 %v116, %v119
    %vm121 = vweird.f32 %v115
    %vm122 = vweird.f32 %v116
    %vm123 = vmor %vm121, %vm122
    %v124 = vsel %vm123, %v116, %v120
    %v125 = vand.u32 2147483647, %v115
    %vm126 = vcmp.eq.f32.partialorder %v125, 8.507059e+37
    %v127 = vand.u32 %v115, 2147483648
    %v128 = vor.u32 1.1754944e-38, %v127
    %v129 = vsel %vm126, %v128, %v124
    %v130 = vmul.f32 1.0, %v129
    %v131 = vmul.f32 %v130, 0.0
    %133 = vrot.lane.b32.xlu0 %v131, 96
    %v134 = vpop.permute.xlu0 %133
    %139 = vrot.lane.b32.xlu0 %v83, 64
    %v140 = vpop.permute.xlu0 %139
    %141 = vrot.lane.b32.xlu0 %v84, 64
    %v142 = vpop.permute.xlu0 %141
    %143 = vrot.lane.b32.xlu0 %v85, 64
    %v144 = vpop.permute.xlu0 %143
    %145 = vrot.lane.b32.xlu0 %v86, 64
    %v146 = vpop.permute.xlu0 %145
    %v151 = vsel %vm87, %v134, 0
    %153 = vmatpush.msra.mxu0 0.0
    %154 = vmatpush.msra.mxu0 0.0
    %155 = vmatpush.msra.mxu0 0.0
    %156 = vmatpush.msra.mxu0 0.0
    %157 = vmatpush.msra.mxu0 0.0
    %158 = vmatpush.msra.mxu0 0.0
    %159 = vmatpush.msra.mxu0 0.0
    %160 = vmatpush.msra.mxu0 0.0
    %161 = vmatpush.msra.mxu0 0.0
    %162 = vmatpush.msra.mxu0 0.0
    %163 = vmatpush.msra.mxu0 0.0
    %164 = vmatpush.msra.mxu0 0.0
    %165 = vmatpush.msra.mxu0 %v146
    %166 = vmatpush.msra.mxu0 %v144
    %167 = vmatpush.msra.mxu0 %v142
    %168 = vmatpush.msra.mxu0 %v140
    %169 = vmatmul.f32.gmra.mxu0 %v151
    %v170 = vpop.f32.mrf.mxu0
    %v171 = vadd.f32 0.0, %v170
    %172 = vdwg.mxu0
    %174 = vrot.lane.b32.xlu0 %v171, 64
    %v175 = vpop.permute.xlu0 %174
    %v177 = vadd.f32 %v78, %v175
    %v178 = vtanh.pop %v177
    %v179 = vsub.f32 1.0, %v130
    %v180 = vmul.f32 %v179, 0.0
    %182 = vrot.lane.b32.xlu0 %v178, 64
    %v183 = vpop.permute.xlu0 %182
    %v185 = vmul.f32 %v130, %v183
    %v186 = vadd.f32 %v180, %v185
    %v188 = vrot.slane %v186, 1
    %vm190 = vcmask 253952
    %191 = vst.msk [vmem:[#allocation2] sm:$0x1] %vm190, %v186
    %192 = vst.msk [vmem:[#allocation2 + $0x8] sm:$0x1] %vm190, %v188
    %v193 = vsel %vm87, %v186, 0
    %195 = vmatpush.msra.mxu0 0.0
    %196 = vmatpush.msra.mxu0 0.0
    %197 = vmatpush.msra.mxu0 0.0
    %198 = vmatpush.msra.mxu0 0.0
    %199 = vmatpush.msra.mxu0 0.0
    %200 = vmatpush.msra.mxu0 0.0
    %201 = vmatpush.msra.mxu0 0.0
    %202 = vmatpush.msra.mxu0 0.0
    %203 = vmatpush.msra.mxu0 0.0
    %204 = vmatpush.msra.mxu0 0.0
    %205 = vmatpush.msra.mxu0 0.0
    %206 = vmatpush.msra.mxu0 0.0
    %207 = vmatpush.msra.mxu0 %v86
    %208 = vmatpush.msra.mxu0 %v85
    %209 = vmatpush.msra.mxu0 %v84
    %210 = vmatpush.msra.mxu0 %v83
    %211 = vmatmul.f32.gmra.mxu0 %v193
    %v212 = vpop.f32.mrf.mxu0
    %v213 = vadd.f32 0.0, %v212
    %214 = vdwg.mxu0
    %v216 = vrot.slane %v213, 6
    %v218 = vadd.f32 %v78, %v216
    %v219 = vxor.u32 %v218, 2147483648
    %v220 = vmul.f32 %v219, 1.442695
    %v221 = vpow.pop %v220
    %v222 = vadd.f32 %v221, 1.0
    %v223 = vrcp.pop %v222
    %v224 = vmul.f32 %v222, %v223
    %v225 = vsub.f32 1.0, %v224
    %v226 = vmul.f32 %v223, %v225
    %v227 = vadd.f32 %v223, %v226
    %vm228 = vweird.f32 %v222
    %vm229 = vweird.f32 %v223
    %vm230 = vmor %vm228, %vm229
    %v231 = vsel %vm230, %v223, %v227
    %v232 = vand.u32 2147483647, %v222
    %vm233 = vcmp.eq.f32.partialorder %v232, 8.507059e+37
    %v234 = vand.u32 %v222, 2147483648
    %v235 = vor.u32 1.1754944e-38, %v234
    %v236 = vsel %vm233, %v235, %v231
    %v237 = vmul.f32 1.0, %v236
    %v238 = vrot.slane %v186, 6
    %239 = vrot.lane.b32.xlu0 %v238, 32
    %v240 = vpop.permute.xlu0 %239
    %v242 = vmul.f32 %v237, %v240
    %v244 = vrot.slane %v242, 2
    %245 = vrot.lane.b32.xlu0 %v244, 96
    %v246 = vpop.permute.xlu0 %245
    %v247 = vsel %vm87, %v246, 0
    %249 = vmatpush.msra.mxu0 0.0
    %250 = vmatpush.msra.mxu0 0.0
    %251 = vmatpush.msra.mxu0 0.0
    %252 = vmatpush.msra.mxu0 0.0
    %253 = vmatpush.msra.mxu0 0.0
    %254 = vmatpush.msra.mxu0 0.0
    %255 = vmatpush.msra.mxu0 0.0
    %256 = vmatpush.msra.mxu0 0.0
    %257 = vmatpush.msra.mxu0 0.0
    %258 = vmatpush.msra.mxu0 0.0
    %259 = vmatpush.msra.mxu0 0.0
    %260 = vmatpush.msra.mxu0 0.0
    %261 = vmatpush.msra.mxu0 %v146
    %262 = vmatpush.msra.mxu0 %v144
    %263 = vmatpush.msra.mxu0 %v142
    %264 = vmatpush.msra.mxu0 %v140
    %265 = vmatmul.f32.gmra.mxu0 %v247
    %v266 = vpop.f32.mrf.mxu0
    %v267 = vadd.f32 0.0, %v266
    %268 = vdwg.mxu0
    %v270 = vrot.slane %v267, 6
    %271 = vrot.lane.b32.xlu0 %v270, 64
    %v272 = vpop.permute.xlu0 %271
    %v274 = vadd.f32 %v78, %v272
    %v275 = vtanh.pop %v274
    %v276 = vsub.f32 1.0, %v237
    %v278 = vmul.f32 %v276, %v238
    %280 = vrot.lane.b32.xlu0 %v275, 64
    %v281 = vpop.permute.xlu0 %280
    %v283 = vmul.f32 %v237, %v281
    %v284 = vadd.f32 %v278, %v283
    %286 = vst [vmem:[#allocation1] sm:$0xff] %v284
    %s287 = scalar_lea.vmem [#allocation1], 2
    %v288 = vld [vmem:[%s287] ss:$9 sm:$0xff]
    %s289 = scalar_lea.vmem [#allocation1], 3
    %v290 = vld [vmem:[%s289] ss:$9 sm:$0xff]
    %293 = vst.msk [vmem:[#allocation2 + $0x1] sm:$0x1] %vm190, %v288
    %294 = vst.msk [vmem:[#allocation2 + $0x9] sm:$0x1] %vm190, %v290
    %v295 = vrot.slane %v284, 2
    %v296 = vsel %vm87, %v295, 0
    %298 = vmatpush.msra.mxu0 0.0
    %299 = vmatpush.msra.mxu0 0.0
    %300 = vmatpush.msra.mxu0 0.0
    %301 = vmatpush.msra.mxu0 0.0
    %302 = vmatpush.msra.mxu0 0.0
    %303 = vmatpush.msra.mxu0 0.0
    %304 = vmatpush.msra.mxu0 0.0
    %305 = vmatpush.msra.mxu0 0.0
    %306 = vmatpush.msra.mxu0 0.0
    %307 = vmatpush.msra.mxu0 0.0
    %308 = vmatpush.msra.mxu0 0.0
    %309 = vmatpush.msra.mxu0 0.0
    %310 = vmatpush.msra.mxu0 %v86
    %311 = vmatpush.msra.mxu0 %v85
    %312 = vmatpush.msra.mxu0 %v84
    %313 = vmatpush.msra.mxu0 %v83
    %314 = vmatmul.f32.gmra.mxu0 %v296
    %v315 = vpop.f32.mrf.mxu0
    %v316 = vadd.f32 0.0, %v315
    %317 = vdwg.mxu0
    %v319 = vrot.slane %v316, 4
    %v321 = vadd.f32 %v78, %v319
    %v322 = vxor.u32 %v321, 2147483648
    %v323 = vmul.f32 %v322, 1.442695
    %v324 = vpow.pop %v323
    %v325 = vadd.f32 %v324, 1.0
    %v326 = vrcp.pop %v325
    %v327 = vmul.f32 %v325, %v326
    %v328 = vsub.f32 1.0, %v327
    %v329 = vmul.f32 %v326, %v328
    %v330 = vadd.f32 %v326, %v329
    %vm331 = vweird.f32 %v325
    %vm332 = vweird.f32 %v326
    %vm333 = vmor %vm331, %vm332
    %v334 = vsel %vm333, %v326, %v330
    %v335 = vand.u32 2147483647, %v325
    %vm336 = vcmp.eq.f32.partialorder %v335, 8.507059e+37
    %v337 = vand.u32 %v325, 2147483648
    %v338 = vor.u32 1.1754944e-38, %v337
    %v339 = vsel %vm336, %v338, %v334
    %v340 = vmul.f32 1.0, %v339
    %v341 = vrot.slane %v284, 6
    %342 = vrot.lane.b32.xlu0 %v341, 32
    %v343 = vpop.permute.xlu0 %342
    %v345 = vmul.f32 %v340, %v343
    %v347 = vrot.slane %v345, 4
    %348 = vrot.lane.b32.xlu0 %v347, 96
    %v349 = vpop.permute.xlu0 %348
    %v350 = vsel %vm87, %v349, 0
    %352 = vmatpush.msra.mxu0 0.0
    %353 = vmatpush.msra.mxu0 0.0
    %354 = vmatpush.msra.mxu0 0.0
    %355 = vmatpush.msra.mxu0 0.0
    %356 = vmatpush.msra.mxu0 0.0
    %357 = vmatpush.msra.mxu0 0.0
    %358 = vmatpush.msra.mxu0 0.0
    %359 = vmatpush.msra.mxu0 0.0
    %360 = vmatpush.msra.mxu0 0.0
    %361 = vmatpush.msra.mxu0 0.0
    %362 = vmatpush.msra.mxu0 0.0
    %363 = vmatpush.msra.mxu0 0.0
    %364 = vmatpush.msra.mxu0 %v146
    %365 = vmatpush.msra.mxu0 %v144
    %366 = vmatpush.msra.mxu0 %v142
    %367 = vmatpush.msra.mxu0 %v140
    %368 = vmatmul.f32.gmra.mxu0 %v350
    %v369 = vpop.f32.mrf.mxu0
    %v370 = vadd.f32 0.0, %v369
    %371 = vdwg.mxu0
    %v373 = vrot.slane %v370, 4
    %374 = vrot.lane.b32.xlu0 %v373, 64
    %v375 = vpop.permute.xlu0 %374
    %v377 = vadd.f32 %v78, %v375
    %v378 = vtanh.pop %v377
    %v379 = vsub.f32 1.0, %v340
    %v381 = vmul.f32 %v379, %v341
    %383 = vrot.lane.b32.xlu0 %v378, 64
    %v384 = vpop.permute.xlu0 %383
    %v386 = vmul.f32 %v340, %v384
    %v387 = vadd.f32 %v381, %v386
    %389 = vst [vmem:[#allocation1] sm:$0xff] %v387
    %s390 = scalar_lea.vmem [#allocation1], 4
    %v391 = vld [vmem:[%s390] ss:$9 sm:$0xff]
    %s392 = scalar_lea.vmem [#allocation1], 5
    %v393 = vld [vmem:[%s392] ss:$9 sm:$0xff]
    %396 = vst.msk [vmem:[#allocation2 + $0x2] sm:$0x1] %vm190, %v391
    %397 = vst.msk [vmem:[#allocation2 + $0xa] sm:$0x1] %vm190, %v393
    %v398 = vrot.slane %v387, 4
    %v399 = vsel %vm87, %v398, 0
    %401 = vmatpush.msra.mxu0 0.0
    %402 = vmatpush.msra.mxu0 0.0
    %403 = vmatpush.msra.mxu0 0.0
    %404 = vmatpush.msra.mxu0 0.0
    %405 = vmatpush.msra.mxu0 0.0
    %406 = vmatpush.msra.mxu0 0.0
    %407 = vmatpush.msra.mxu0 0.0
    %408 = vmatpush.msra.mxu0 0.0
    %409 = vmatpush.msra.mxu0 0.0
    %410 = vmatpush.msra.mxu0 0.0
    %411 = vmatpush.msra.mxu0 0.0
    %412 = vmatpush.msra.mxu0 0.0
    %413 = vmatpush.msra.mxu0 %v86
    %414 = vmatpush.msra.mxu0 %v85
    %415 = vmatpush.msra.mxu0 %v84
    %416 = vmatpush.msra.mxu0 %v83
    %417 = vmatmul.f32.gmra.mxu0 %v399
    %v418 = vpop.f32.mrf.mxu0
    %v419 = vadd.f32 0.0, %v418
    %420 = vdwg.mxu0
    %v422 = vrot.slane %v419, 2
    %v424 = vadd.f32 %v78, %v422
    %v425 = vxor.u32 %v424, 2147483648
    %v426 = vmul.f32 %v425, 1.442695
    %v427 = vpow.pop %v426
    %v428 = vadd.f32 %v427, 1.0
    %v429 = vrcp.pop %v428
    %v430 = vmul.f32 %v428, %v429
    %v431 = vsub.f32 1.0, %v430
    %v432 = vmul.f32 %v429, %v431
    %v433 = vadd.f32 %v429, %v432
    %vm434 = vweird.f32 %v428
    %vm435 = vweird.f32 %v429
    %vm436 = vmor %vm434, %vm435
    %v437 = vsel %vm436, %v429, %v433
    %v438 = vand.u32 2147483647, %v428
    %vm439 = vcmp.eq.f32.partialorder %v438, 8.507059e+37
    %v440 = vand.u32 %v428, 2147483648
    %v441 = vor.u32 1.1754944e-38, %v440
    %v442 = vsel %vm439, %v441, %v437
    %v443 = vmul.f32 1.0, %v442
    %v444 = vrot.slane %v387, 6
    %445 = vrot.lane.b32.xlu0 %v444, 32
    %v446 = vpop.permute.xlu0 %445
    %v448 = vmul.f32 %v443, %v446
    %v450 = vrot.slane %v448, 6
    %451 = vrot.lane.b32.xlu0 %v450, 96
    %v452 = vpop.permute.xlu0 %451
    %v453 = vsel %vm87, %v452, 0
    %455 = vmatpush.msra.mxu0 0.0
    %456 = vmatpush.msra.mxu0 0.0
    %457 = vmatpush.msra.mxu0 0.0
    %458 = vmatpush.msra.mxu0 0.0
    %459 = vmatpush.msra.mxu0 0.0
    %460 = vmatpush.msra.mxu0 0.0
    %461 = vmatpush.msra.mxu0 0.0
    %462 = vmatpush.msra.mxu0 0.0
    %463 = vmatpush.msra.mxu0 0.0
    %464 = vmatpush.msra.mxu0 0.0
    %465 = vmatpush.msra.mxu0 0.0
    %466 = vmatpush.msra.mxu0 0.0
    %467 = vmatpush.msra.mxu0 %v146
    %468 = vmatpush.msra.mxu0 %v144
    %469 = vmatpush.msra.mxu0 %v142
    %470 = vmatpush.msra.mxu0 %v140
    %471 = vmatmul.f32.gmra.mxu0 %v453
    %v472 = vpop.f32.mrf.mxu0
    %v473 = vadd.f32 0.0, %v472
    %474 = vdwg.mxu0
    %v476 = vrot.slane %v473, 2
    %477 = vrot.lane.b32.xlu0 %v476, 64
    %v478 = vpop.permute.xlu0 %477
    %v480 = vadd.f32 %v78, %v478
    %v481 = vtanh.pop %v480
    %v482 = vsub.f32 1.0, %v443
    %v484 = vmul.f32 %v482, %v444
    %486 = vrot.lane.b32.xlu0 %v481, 64
    %v487 = vpop.permute.xlu0 %486
    %v489 = vmul.f32 %v443, %v487
    %v490 = vadd.f32 %v484, %v489
    %492 = vst [vmem:[#allocation1] sm:$0xff] %v490
    %s493 = scalar_lea.vmem [#allocation1], 6
    %v494 = vld [vmem:[%s493] ss:$9 sm:$0xff]
    %s495 = scalar_lea.vmem [#allocation1], 7
    %v496 = vld [vmem:[%s495] ss:$9 sm:$0xff]
    %499 = vst.msk [vmem:[#allocation2 + $0x3] sm:$0x1] %vm190, %v494
    %500 = vst.msk [vmem:[#allocation2 + $0xb] sm:$0x1] %vm190, %v496
    %v501 = vrot.slane %v490, 6
    %v502 = vsel %vm87, %v501, 0
    %504 = vmatpush.msra.mxu0 0.0
    %505 = vmatpush.msra.mxu0 0.0
    %506 = vmatpush.msra.mxu0 0.0
    %507 = vmatpush.msra.mxu0 0.0
    %508 = vmatpush.msra.mxu0 0.0
    %509 = vmatpush.msra.mxu0 0.0
    %510 = vmatpush.msra.mxu0 0.0
    %511 = vmatpush.msra.mxu0 0.0
    %512 = vmatpush.msra.mxu0 0.0
    %513 = vmatpush.msra.mxu0 0.0
    %514 = vmatpush.msra.mxu0 0.0
    %515 = vmatpush.msra.mxu0 0.0
    %516 = vmatpush.msra.mxu0 %v86
    %517 = vmatpush.msra.mxu0 %v85
    %518 = vmatpush.msra.mxu0 %v84
    %519 = vmatpush.msra.mxu0 %v83
    %520 = vmatmul.f32.gmra.mxu0 %v502
    %v521 = vpop.f32.mrf.mxu0
    %v522 = vadd.f32 0.0, %v521
    %523 = vdwg.mxu0
    %v524 = vadd.f32 %v81, %v522
    %v525 = vxor.u32 %v524, 2147483648
    %v526 = vmul.f32 %v525, 1.442695
    %v527 = vpow.pop %v526
    %v528 = vadd.f32 %v527, 1.0
    %v529 = vrcp.pop %v528
    %v530 = vmul.f32 %v528, %v529
    %v531 = vsub.f32 1.0, %v530
    %v532 = vmul.f32 %v529, %v531
    %v533 = vadd.f32 %v529, %v532
    %vm534 = vweird.f32 %v528
    %vm535 = vweird.f32 %v529
    %vm536 = vmor %vm534, %vm535
    %v537 = vsel %vm536, %v529, %v533
    %v538 = vand.u32 2147483647, %v528
    %vm539 = vcmp.eq.f32.partialorder %v538, 8.507059e+37
    %v540 = vand.u32 %v528, 2147483648
    %v541 = vor.u32 1.1754944e-38, %v540
    %v542 = vsel %vm539, %v541, %v537
    %v543 = vmul.f32 1.0, %v542
    %544 = vrot.lane.b32.xlu0 %v501, 32
    %v545 = vpop.permute.xlu0 %544
    %v547 = vmul.f32 %v543, %v545
    %549 = vrot.lane.b32.xlu0 %v547, 96
    %v550 = vpop.permute.xlu0 %549
    %v551 = vsel %vm87, %v550, 0
    %553 = vmatpush.msra.mxu0 0.0
    %554 = vmatpush.msra.mxu0 0.0
    %555 = vmatpush.msra.mxu0 0.0
    %556 = vmatpush.msra.mxu0 0.0
    %557 = vmatpush.msra.mxu0 0.0
    %558 = vmatpush.msra.mxu0 0.0
    %559 = vmatpush.msra.mxu0 0.0
    %560 = vmatpush.msra.mxu0 0.0
    %561 = vmatpush.msra.mxu0 0.0
    %562 = vmatpush.msra.mxu0 0.0
    %563 = vmatpush.msra.mxu0 0.0
    %564 = vmatpush.msra.mxu0 0.0
    %565 = vmatpush.msra.mxu0 %v146
    %566 = vmatpush.msra.mxu0 %v144
    %567 = vmatpush.msra.mxu0 %v142
    %568 = vmatpush.msra.mxu0 %v140
    %569 = vmatmul.f32.gmra.mxu0 %v551
    %v570 = vpop.f32.mrf.mxu0
    %v571 = vadd.f32 0.0, %v570
    %572 = vdwg.mxu0
    %574 = vrot.lane.b32.xlu0 %v571, 64
    %v575 = vpop.permute.xlu0 %574
    %v577 = vadd.f32 %v81, %v575
    %v578 = vtanh.pop %v577
    %v579 = vsub.f32 1.0, %v543
    %v581 = vmul.f32 %v579, %v501
    %583 = vrot.lane.b32.xlu0 %v578, 64
    %v584 = vpop.permute.xlu0 %583
    %v586 = vmul.f32 %v543, %v584
    %v587 = vadd.f32 %v581, %v586
    %v589 = vrot.slane %v587, 1
    %591 = vst.msk [vmem:[#allocation2 + $0x4] sm:$0x1] %vm190, %v587
    %592 = vst.msk [vmem:[#allocation2 + $0xc] sm:$0x1] %vm190, %v589
    %v593 = vsel %vm87, %v587, 0
    %595 = vmatpush.msra.mxu0 0.0
    %596 = vmatpush.msra.mxu0 0.0
    %597 = vmatpush.msra.mxu0 0.0
    %598 = vmatpush.msra.mxu0 0.0
    %599 = vmatpush.msra.mxu0 0.0
    %600 = vmatpush.msra.mxu0 0.0
    %601 = vmatpush.msra.mxu0 0.0
    %602 = vmatpush.msra.mxu0 0.0
    %603 = vmatpush.msra.mxu0 0.0
    %604 = vmatpush.msra.mxu0 0.0
    %605 = vmatpush.msra.mxu0 0.0
    %606 = vmatpush.msra.mxu0 0.0
    %607 = vmatpush.msra.mxu0 %v86
    %608 = vmatpush.msra.mxu0 %v85
    %609 = vmatpush.msra.mxu0 %v84
    %610 = vmatpush.msra.mxu0 %v83
    %611 = vmatmul.f32.gmra.mxu0 %v593
    %v612 = vpop.f32.mrf.mxu0
    %v613 = vadd.f32 0.0, %v612
    %614 = vdwg.mxu0
    %v616 = vrot.slane %v613, 6
    %v618 = vadd.f32 %v81, %v616
    %v619 = vxor.u32 %v618, 2147483648
    %v620 = vmul.f32 %v619, 1.442695
    %v621 = vpow.pop %v620
    %v622 = vadd.f32 %v621, 1.0
    %v623 = vrcp.pop %v622
    %v624 = vmul.f32 %v622, %v623
    %v625 = vsub.f32 1.0, %v624
    %v626 = vmul.f32 %v623, %v625
    %v627 = vadd.f32 %v623, %v626
    %vm628 = vweird.f32 %v622
    %vm629 = vweird.f32 %v623
    %vm630 = vmor %vm628, %vm629
    %v631 = vsel %vm630, %v623, %v627
    %v632 = vand.u32 2147483647, %v622
    %vm633 = vcmp.eq.f32.partialorder %v632, 8.507059e+37
    %v634 = vand.u32 %v622, 2147483648
    %v635 = vor.u32 1.1754944e-38, %v634
    %v636 = vsel %vm633, %v635, %v631
    %v637 = vmul.f32 1.0, %v636
    %v638 = vrot.slane %v587, 6
    %639 = vrot.lane.b32.xlu0 %v638, 32
    %v640 = vpop.permute.xlu0 %639
    %v642 = vmul.f32 %v637, %v640
    %v644 = vrot.slane %v642, 2
    %645 = vrot.lane.b32.xlu0 %v644, 96
    %v646 = vpop.permute.xlu0 %645
    %v647 = vsel %vm87, %v646, 0
    %649 = vmatpush.msra.mxu0 0.0
    %650 = vmatpush.msra.mxu0 0.0
    %651 = vmatpush.msra.mxu0 0.0
    %652 = vmatpush.msra.mxu0 0.0
    %653 = vmatpush.msra.mxu0 0.0
    %654 = vmatpush.msra.mxu0 0.0
    %655 = vmatpush.msra.mxu0 0.0
    %656 = vmatpush.msra.mxu0 0.0
    %657 = vmatpush.msra.mxu0 0.0
    %658 = vmatpush.msra.mxu0 0.0
    %659 = vmatpush.msra.mxu0 0.0
    %660 = vmatpush.msra.mxu0 0.0
    %661 = vmatpush.msra.mxu0 %v146
    %662 = vmatpush.msra.mxu0 %v144
    %663 = vmatpush.msra.mxu0 %v142
    %664 = vmatpush.msra.mxu0 %v140
    %665 = vmatmul.f32.gmra.mxu0 %v647
    %v666 = vpop.f32.mrf.mxu0
    %v667 = vadd.f32 0.0, %v666
    %668 = vdwg.mxu0
    %v670 = vrot.slane %v667, 6
    %671 = vrot.lane.b32.xlu0 %v670, 64
    %v672 = vpop.permute.xlu0 %671
    %v674 = vadd.f32 %v81, %v672
    %v675 = vtanh.pop %v674
    %v676 = vsub.f32 1.0, %v637
    %v678 = vmul.f32 %v676, %v638
    %680 = vrot.lane.b32.xlu0 %v675, 64
    %v681 = vpop.permute.xlu0 %680
    %v683 = vmul.f32 %v637, %v681
    %v684 = vadd.f32 %v678, %v683
    %686 = vst [vmem:[#allocation1] sm:$0xff] %v684
    %s687 = scalar_lea.vmem [#allocation1], 2
    %v688 = vld [vmem:[%s687] ss:$9 sm:$0xff]
    %s689 = scalar_lea.vmem [#allocation1], 3
    %v690 = vld [vmem:[%s689] ss:$9 sm:$0xff]
    %693 = vst.msk [vmem:[#allocation2 + $0x5] sm:$0x1] %vm190, %v688
    %694 = vst.msk [vmem:[#allocation2 + $0xd] sm:$0x1] %vm190, %v690
    %v695 = vrot.slane %v684, 2
    %v696 = vsel %vm87, %v695, 0
    %698 = vmatpush.msra.mxu0 0.0
    %699 = vmatpush.msra.mxu0 0.0
    %700 = vmatpush.msra.mxu0 0.0
    %701 = vmatpush.msra.mxu0 0.0
    %702 = vmatpush.msra.mxu0 0.0
    %703 = vmatpush.msra.mxu0 0.0
    %704 = vmatpush.msra.mxu0 0.0
    %705 = vmatpush.msra.mxu0 0.0
    %706 = vmatpush.msra.mxu0 0.0
    %707 = vmatpush.msra.mxu0 0.0
    %708 = vmatpush.msra.mxu0 0.0
    %709 = vmatpush.msra.mxu0 0.0
    %710 = vmatpush.msra.mxu0 %v86
    %711 = vmatpush.msra.mxu0 %v85
    %712 = vmatpush.msra.mxu0 %v84
    %713 = vmatpush.msra.mxu0 %v83
    %714 = vmatmul.f32.gmra.mxu0 %v696
    %v715 = vpop.f32.mrf.mxu0
    %v716 = vadd.f32 0.0, %v715
    %717 = vdwg.mxu0
    %v719 = vrot.slane %v716, 4
    %v721 = vadd.f32 %v81, %v719
    %v722 = vxor.u32 %v721, 2147483648
    %v723 = vmul.f32 %v722, 1.442695
    %v724 = vpow.pop %v723
    %v725 = vadd.f32 %v724, 1.0
    %v726 = vrcp.pop %v725
    %v727 = vmul.f32 %v725, %v726
    %v728 = vsub.f32 1.0, %v727
    %v729 = vmul.f32 %v726, %v728
    %v730 = vadd.f32 %v726, %v729
    %vm731 = vweird.f32 %v725
    %vm732 = vweird.f32 %v726
    %vm733 = vmor %vm731, %vm732
    %v734 = vsel %vm733, %v726, %v730
    %v735 = vand.u32 2147483647, %v725
    %vm736 = vcmp.eq.f32.partialorder %v735, 8.507059e+37
    %v737 = vand.u32 %v725, 2147483648
    %v738 = vor.u32 1.1754944e-38, %v737
    %v739 = vsel %vm736, %v738, %v734
    %v740 = vmul.f32 1.0, %v739
    %v741 = vrot.slane %v684, 6
    %742 = vrot.lane.b32.xlu0 %v741, 32
    %v743 = vpop.permute.xlu0 %742
    %v745 = vmul.f32 %v740, %v743
    %v747 = vrot.slane %v745, 4
    %748 = vrot.lane.b32.xlu0 %v747, 96
    %v749 = vpop.permute.xlu0 %748
    %v750 = vsel %vm87, %v749, 0
    %752 = vmatpush.msra.mxu0 0.0
    %753 = vmatpush.msra.mxu0 0.0
    %754 = vmatpush.msra.mxu0 0.0
    %755 = vmatpush.msra.mxu0 0.0
    %756 = vmatpush.msra.mxu0 0.0
    %757 = vmatpush.msra.mxu0 0.0
    %758 = vmatpush.msra.mxu0 0.0
    %759 = vmatpush.msra.mxu0 0.0
    %760 = vmatpush.msra.mxu0 0.0
    %761 = vmatpush.msra.mxu0 0.0
    %762 = vmatpush.msra.mxu0 0.0
    %763 = vmatpush.msra.mxu0 0.0
    %764 = vmatpush.msra.mxu0 %v146
    %765 = vmatpush.msra.mxu0 %v144
    %766 = vmatpush.msra.mxu0 %v142
    %767 = vmatpush.msra.mxu0 %v140
    %768 = vmatmul.f32.gmra.mxu0 %v750
    %v769 = vpop.f32.mrf.mxu0
    %v770 = vadd.f32 0.0, %v769
    %771 = vdwg.mxu0
    %v773 = vrot.slane %v770, 4
    %774 = vrot.lane.b32.xlu0 %v773, 64
    %v775 = vpop.permute.xlu0 %774
    %v777 = vadd.f32 %v81, %v775
    %v778 = vtanh.pop %v777
    %v779 = vsub.f32 1.0, %v740
    %v781 = vmul.f32 %v779, %v741
    %783 = vrot.lane.b32.xlu0 %v778, 64
    %v784 = vpop.permute.xlu0 %783
    %v786 = vmul.f32 %v740, %v784
    %v787 = vadd.f32 %v781, %v786
    %789 = vst [vmem:[#allocation1] sm:$0xff] %v787
    %s790 = scalar_lea.vmem [#allocation1], 4
    %v791 = vld [vmem:[%s790] ss:$9 sm:$0xff]
    %s792 = scalar_lea.vmem [#allocation1], 5
    %v793 = vld [vmem:[%s792] ss:$9 sm:$0xff]
    %796 = vst.msk [vmem:[#allocation2 + $0x6] sm:$0x1] %vm190, %v791
    %797 = vst.msk [vmem:[#allocation2 + $0xe] sm:$0x1] %vm190, %v793
    %v798 = vrot.slane %v787, 4
    %v799 = vsel %vm87, %v798, 0
    %801 = vmatpush.msra.mxu0 0.0
    %802 = vmatpush.msra.mxu0 0.0
    %803 = vmatpush.msra.mxu0 0.0
    %804 = vmatpush.msra.mxu0 0.0
    %805 = vmatpush.msra.mxu0 0.0
    %806 = vmatpush.msra.mxu0 0.0
    %807 = vmatpush.msra.mxu0 0.0
    %808 = vmatpush.msra.mxu0 0.0
    %809 = vmatpush.msra.mxu0 0.0
    %810 = vmatpush.msra.mxu0 0.0
    %811 = vmatpush.msra.mxu0 0.0
    %812 = vmatpush.msra.mxu0 0.0
    %813 = vmatpush.msra.mxu0 %v86
    %814 = vmatpush.msra.mxu0 %v85
    %815 = vmatpush.msra.mxu0 %v84
    %816 = vmatpush.msra.mxu0 %v83
    %817 = vmatmul.f32.gmra.mxu0 %v799
    %v818 = vpop.f32.mrf.mxu0
    %v819 = vadd.f32 0.0, %v818
    %820 = vdwg.mxu0
    %v822 = vrot.slane %v819, 2
    %v824 = vadd.f32 %v81, %v822
    %v825 = vxor.u32 %v824, 2147483648
    %v826 = vmul.f32 %v825, 1.442695
    %v827 = vpow.pop %v826
    %v828 = vadd.f32 %v827, 1.0
    %v829 = vrcp.pop %v828
    %v830 = vmul.f32 %v828, %v829
    %v831 = vsub.f32 1.0, %v830
    %v832 = vmul.f32 %v829, %v831
    %v833 = vadd.f32 %v829, %v832
    %vm834 = vweird.f32 %v828
    %vm835 = vweird.f32 %v829
    %vm836 = vmor %vm834, %vm835
    %v837 = vsel %vm836, %v829, %v833
    %v838 = vand.u32 2147483647, %v828
    %vm839 = vcmp.eq.f32.partialorder %v838, 8.507059e+37
    %v840 = vand.u32 %v828, 2147483648
    %v841 = vor.u32 1.1754944e-38, %v840
    %v842 = vsel %vm839, %v841, %v837
    %v843 = vmul.f32 1.0, %v842
    %v844 = vrot.slane %v787, 6
    %845 = vrot.lane.b32.xlu0 %v844, 32
    %v846 = vpop.permute.xlu0 %845
    %v848 = vmul.f32 %v843, %v846
    %v850 = vrot.slane %v848, 6
    %851 = vrot.lane.b32.xlu0 %v850, 96
    %v852 = vpop.permute.xlu0 %851
    %v853 = vsel %vm87, %v852, 0
    %855 = vmatpush.msra.mxu0 0.0
    %856 = vmatpush.msra.mxu0 0.0
    %857 = vmatpush.msra.mxu0 0.0
    %858 = vmatpush.msra.mxu0 0.0
    %859 = vmatpush.msra.mxu0 0.0
    %860 = vmatpush.msra.mxu0 0.0
    %861 = vmatpush.msra.mxu0 0.0
    %862 = vmatpush.msra.mxu0 0.0
    %863 = vmatpush.msra.mxu0 0.0
    %864 = vmatpush.msra.mxu0 0.0
    %865 = vmatpush.msra.mxu0 0.0
    %866 = vmatpush.msra.mxu0 0.0
    %867 = vmatpush.msra.mxu0 %v146
    %868 = vmatpush.msra.mxu0 %v144
    %869 = vmatpush.msra.mxu0 %v142
    %870 = vmatpush.msra.mxu0 %v140
    %871 = vmatmul.f32.gmra.mxu0 %v853
    %v872 = vpop.f32.mrf.mxu0
    %v873 = vadd.f32 0.0, %v872
    %874 = vdwg.mxu0
    %v876 = vrot.slane %v873, 2
    %877 = vrot.lane.b32.xlu0 %v876, 64
    %v878 = vpop.permute.xlu0 %877
    %v880 = vadd.f32 %v81, %v878
    %v881 = vtanh.pop %v880
    %v882 = vsub.f32 1.0, %v843
    %v884 = vmul.f32 %v882, %v844
    %886 = vrot.lane.b32.xlu0 %v881, 64
    %v887 = vpop.permute.xlu0 %886
    %v889 = vmul.f32 %v843, %v887
    %v890 = vadd.f32 %v884, %v889
    %892 = vst [vmem:[#allocation1] sm:$0xff] %v890
    %s893 = scalar_lea.vmem [#allocation1], 6
    %v894 = vld [vmem:[%s893] ss:$9 sm:$0xff]
    %s895 = scalar_lea.vmem [#allocation1], 7
    %v896 = vld [vmem:[%s895] ss:$9 sm:$0xff]
    %899 = vst.msk [vmem:[#allocation2 + $0x7] sm:$0x1] %vm190, %v894
    %900 = vst.msk [vmem:[#allocation2 + $0xf] sm:$0x1] %vm190, %v896
    %v901 = vld [vmem:[#allocation2] sm:$0xff]
    %v902 = vld [vmem:[#allocation2 + $0x8] sm:$0xff]
    %v903 = vld [vmem:[%s3] sm:$0xff]
    %v904 = vld [vmem:[%s3 + $0x8] sm:$0xff]
    %v905 = vld [vmem:[%s3 + $0x10] sm:$0xff]
    %v906 = vld [vmem:[%s3 + $0x18] sm:$0xff]
    %v907 = vld [vmem:[%s3 + $0xf0] sm:$0x1]
    %v908 = vperm.slane %v907, 0
    %913 = vrot.lane.b32.xlu0 %v903, 32
    %v914 = vpop.permute.xlu0 %913
    %915 = vrot.lane.b32.xlu0 %v904, 32
    %v916 = vpop.permute.xlu0 %915
    %917 = vrot.lane.b32.xlu0 %v905, 32
    %v918 = vpop.permute.xlu0 %917
    %919 = vrot.lane.b32.xlu0 %v906, 32
    %v920 = vpop.permute.xlu0 %919
    %926 = vrot.lane.b32.xlu0 %v908, 32
    %v927 = vpop.permute.xlu0 %926
    %v930 = vsel %vm87, %v901, 0
    %v933 = vsel %vm87, %v902, 0
    %935 = vmatpush.msra.mxu0 0.0
    %936 = vmatpush.msra.mxu0 0.0
    %937 = vmatpush.msra.mxu0 0.0
    %938 = vmatpush.msra.mxu0 0.0
    %939 = vmatpush.msra.mxu0 0.0
    %940 = vmatpush.msra.mxu0 0.0
    %941 = vmatpush.msra.mxu0 0.0
    %942 = vmatpush.msra.mxu0 0.0
    %943 = vmatpush.msra.mxu0 0.0
    %944 = vmatpush.msra.mxu0 0.0
    %945 = vmatpush.msra.mxu0 0.0
    %946 = vmatpush.msra.mxu0 0.0
    %947 = vmatpush.msra.mxu0 %v920
    %948 = vmatpush.msra.mxu0 %v918
    %949 = vmatpush.msra.mxu0 %v916
    %950 = vmatpush.msra.mxu0 %v914
    %951 = vmatmul.f32.gmra.mxu0 %v930
    %v952 = vpop.f32.mrf.mxu0
    %v953 = vadd.f32 %v927, %v952
    %954 = vmatmul.f32.gmra.mxu0 %v933
    %v955 = vpop.f32.mrf.mxu0
    %v956 = vadd.f32 %v927, %v955
    %957 = vdwg.mxu0
    %v958 = vmax.f32 %v953, 0.0
    %v959 = vmax.f32 %v956, 0.0
    %v960 = vld [vmem:[%s3 + $0xb0] sm:$0xff]
    %v961 = vld [vmem:[%s3 + $0xb8] sm:$0xff]
    %v962 = vld [vmem:[%s3 + $0xc0] sm:$0xff]
    %v963 = vld [vmem:[%s3 + $0xc8] sm:$0xff]
    %v964 = vld [vmem:[%s3 + $0xf2] sm:$0x1]
    %v965 = vperm.slane %v964, 0
    %970 = vrot.lane.b32.xlu0 %v960, 16
    %v971 = vpop.permute.xlu0 %970
    %972 = vrot.lane.b32.xlu0 %v961, 16
    %v973 = vpop.permute.xlu0 %972
    %974 = vrot.lane.b32.xlu0 %v962, 16
    %v975 = vpop.permute.xlu0 %974
    %976 = vrot.lane.b32.xlu0 %v963, 16
    %v977 = vpop.permute.xlu0 %976
    %983 = vrot.lane.b32.xlu0 %v965, 16
    %v984 = vpop.permute.xlu0 %983
    %v987 = vsel %vm87, %v958, 0
    %v990 = vsel %vm87, %v959, 0
    %992 = vmatpush.msra.mxu0 0.0
    %993 = vmatpush.msra.mxu0 0.0
    %994 = vmatpush.msra.mxu0 0.0
    %995 = vmatpush.msra.mxu0 0.0
    %996 = vmatpush.msra.mxu0 0.0
    %997 = vmatpush.msra.mxu0 0.0
    %998 = vmatpush.msra.mxu0 0.0
    %999 = vmatpush.msra.mxu0 0.0
    %1000 = vmatpush.msra.mxu0 0.0
    %1001 = vmatpush.msra.mxu0 0.0
    %1002 = vmatpush.msra.mxu0 0.0
    %1003 = vmatpush.msra.mxu0 0.0
    %1004 = vmatpush.msra.mxu0 %v977
    %1005 = vmatpush.msra.mxu0 %v975
    %1006 = vmatpush.msra.mxu0 %v973
    %1007 = vmatpush.msra.mxu0 %v971
    %1008 = vmatmul.f32.gmra.mxu0 %v987
    %v1009 = vpop.f32.mrf.mxu0
    %v1010 = vadd.f32 %v984, %v1009
    %1011 = vmatmul.f32.gmra.mxu0 %v990
    %v1012 = vpop.f32.mrf.mxu0
    %v1013 = vadd.f32 %v984, %v1012
    %1014 = vdwg.mxu0
    %v1015 = vlaneseq
    %v1016 = vshrl.u32 %v1015, 7
    %s1017 = sld [smem:[#allocation3]]
    %v1018 = vstv %s1017
    %s1019 = sld [smem:[#allocation3 + $0x1]]
    %v1020 = vstv %s1019
    %vm1021 = vcmp.lt.s32.totalorder %v1016, %v1018
    %vm1022 = vcmp.lt.s32.totalorder %v1016, %v1020
    %v1023 = vsel %vm1021, 1, 0
    %v1024 = vsel %vm1022, 1, 0
    %vm1025 = vcmp.eq.s32.totalorder %v1023, 1
    %vm1026 = vcmp.eq.s32.totalorder %v1024, 1
    %v1027 = vsel %vm1025, %v1010, -1e+09
    %v1028 = vsel %vm1026, %v1013, -1e+09
    %vm1029 = vcmask 15360
    %v1030 = vsel %vm1029, %v1027, -inf
    %v1031 = vrot.slane %v1030, 4
    %v1032 = vmax.f32 %v1030, %v1031
    %v1033 = vrot.slane %v1032, 2
    %v1034 = vmax.f32 %v1032, %v1033
    %v1035 = vrot.slane %v1034, 1
    %v1036 = vmax.f32 %v1034, %v1035
    %v1037 = vsel %vm1029, %v1028, -inf
    %v1038 = vrot.slane %v1037, 4
    %v1039 = vmax.f32 %v1037, %v1038
    %v1040 = vrot.slane %v1039, 2
    %v1041 = vmax.f32 %v1039, %v1040
    %v1042 = vrot.slane %v1041, 1
    %v1043 = vmax.f32 %v1041, %v1042
    %v1044 = vsub.f32 %v1027, %v1036
    %v1045 = vsub.f32 %v1028, %v1043
    %v1046 = vmul.f32 %v1044, 1.442695
    %v1047 = vpow.pop %v1046
    %v1048 = vmul.f32 %v1045, 1.442695
    %v1049 = vpow.pop %v1048
    %v1050 = vsel %vm1029, %v1047, 0.0
    %v1051 = vrot.slane %v1050, 4
    %v1052 = vadd.f32 %v1050, %v1051
    %v1053 = vrot.slane %v1052, 2
    %v1054 = vadd.f32 %v1052, %v1053
    %v1055 = vrot.slane %v1054, 1
    %v1056 = vadd.f32 %v1054, %v1055
    %v1057 = vsel %vm1029, %v1049, 0.0
    %v1058 = vrot.slane %v1057, 4
    %v1059 = vadd.f32 %v1057, %v1058
    %v1060 = vrot.slane %v1059, 2
    %v1061 = vadd.f32 %v1059, %v1060
    %v1062 = vrot.slane %v1061, 1
    %v1063 = vadd.f32 %v1061, %v1062
    %v1064 = vmax.f32 %v1056, 1e-30
    %v1065 = vmax.f32 %v1063, 1e-30
    %v1066 = vrcp.pop %v1064
    %v1067 = vrcp.pop %v1065
    %v1068 = vmul.f32 %v1047, %v1066
    %v1069 = vmul.f32 %v1049, %v1067
    %1071 = vset.pattern.permute.xlu0 0
    %1072 = vperm.xlu0 %1071, %v1068
    %v1073 = vpop.permute.xlu0 %1072
    %1076 = vset.pattern.permute.xlu0 0
    %1077 = vperm.xlu0 %1076, %v1069
    %v1078 = vpop.permute.xlu0 %1077
    %v1080 = vmul.f32 %v1073, %v901
    %v1081 = vmul.f32 %v1078, %v902
    %v1082 = vsel %vm87, %v1080, 0.0
    %v1083 = vrot.slane %v1082, 4
    %v1084 = vadd.f32 %v1082, %v1083
    %v1085 = vrot.slane %v1084, 2
    %v1086 = vadd.f32 %v1084, %v1085
    %v1087 = vrot.slane %v1086, 1
    %v1088 = vadd.f32 %v1086, %v1087
    %v1089 = vsel %vm87, %v1081, 0.0
    %v1090 = vrot.slane %v1089, 4
    %v1091 = vadd.f32 %v1089, %v1090
    %v1092 = vrot.slane %v1091, 2
    %v1093 = vadd.f32 %v1091, %v1092
    %v1094 = vrot.slane %v1093, 1
    %v1095 = vadd.f32 %v1093, %v1094
    %1096 = vset.pattern.permute.xlu0 1
    %1097 = vperm.xlu0 %1096, %v1068
    %v1098 = vpop.permute.xlu0 %1097
    %1100 = vset.pattern.permute.xlu0 1
    %1101 = vperm.xlu0 %1100, %v1069
    %v1102 = vpop.permute.xlu0 %1101
    %v1104 = vmul.f32 %v1098, %v901
    %v1105 = vmul.f32 %v1102, %v902
    %v1106 = vsel %vm87, %v1104, 0.0
    %v1107 = vrot.slane %v1106, 4
    %v1108 = vadd.f32 %v1106, %v1107
    %v1109 = vrot.slane %v1108, 2
    %v1110 = vadd.f32 %v1108, %v1109
    %v1111 = vrot.slane %v1110, 1
    %v1112 = vadd.f32 %v1110, %v1111
    %v1113 = vsel %vm87, %v1105, 0.0
    %v1114 = vrot.slane %v1113, 4
    %v1115 = vadd.f32 %v1113, %v1114
    %v1116 = vrot.slane %v1115, 2
    %v1117 = vadd.f32 %v1115, %v1116
    %v1118 = vrot.slane %v1117, 1
    %v1119 = vadd.f32 %v1117, %v1118
    %vm1122 = vcmask 1041409
    %v1123 = vsel %vm1122, %v1095, %v1088
    %v1127 = vsel %vm1122, %v1119, %v1112
    %1128 = vrot.lane.b32.xlu0 %v1127, 32
    %v1129 = vpop.permute.xlu0 %1128
    %v1131 = vsel %vm87, %v1123, %v1129
    %v1132 = vld [vmem:[#allocation7] sm:$0xff]
    %v1133 = vld [vmem:[#allocation7 + $0x8] sm:$0xff]
    %v1134 = vld [vmem:[%s3 + $0x30] sm:$0xff]
    %v1135 = vld [vmem:[%s3 + $0x38] sm:$0xff]
    %v1136 = vld [vmem:[%s3 + $0x40] sm:$0xff]
    %v1137 = vld [vmem:[%s3 + $0x48] sm:$0xff]
    %v1138 = vld [vmem:[%s3 + $0x50] sm:$0xff]
    %v1139 = vld [vmem:[%s3 + $0x58] sm:$0xff]
    %v1140 = vld [vmem:[%s3 + $0x60] sm:$0xff]
    %v1141 = vld [vmem:[%s3 + $0x68] sm:$0xff]
    %1150 = vrot.lane.b32.xlu0 %v1134, 64
    %v1151 = vpop.permute.xlu0 %1150
    %1152 = vrot.lane.b32.xlu0 %v1135, 64
    %v1153 = vpop.permute.xlu0 %1152
    %1154 = vrot.lane.b32.xlu0 %v1136, 64
    %v1155 = vpop.permute.xlu0 %1154
    %1156 = vrot.lane.b32.xlu0 %v1137, 64
    %v1157 = vpop.permute.xlu0 %1156
    %1158 = vrot.lane.b32.xlu0 %v1138, 64
    %v1159 = vpop.permute.xlu0 %1158
    %1160 = vrot.lane.b32.xlu0 %v1139, 64
    %v1161 = vpop.permute.xlu0 %1160
    %1162 = vrot.lane.b32.xlu0 %v1140, 64
    %v1163 = vpop.permute.xlu0 %1162
    %1164 = vrot.lane.b32.xlu0 %v1141, 64
    %v1165 = vpop.permute.xlu0 %1164
    %vm1174 = vcmask 523264
    %v1176 = vsel %vm1174, %v1131, 0
    %1178 = vmatpush.msra.mxu0 0.0
    %1179 = vmatpush.msra.mxu0 0.0
    %1180 = vmatpush.msra.mxu0 0.0
    %1181 = vmatpush.msra.mxu0 0.0
    %1182 = vmatpush.msra.mxu0 0.0
    %1183 = vmatpush.msra.mxu0 0.0
    %1184 = vmatpush.msra.mxu0 0.0
    %1185 = vmatpush.msra.mxu0 0.0
    %1186 = vmatpush.msra.mxu0 %v1165
    %1187 = vmatpush.msra.mxu0 %v1163
    %1188 = vmatpush.msra.mxu0 %v1161
    %1189 = vmatpush.msra.mxu0 %v1159
    %1190 = vmatpush.msra.mxu0 %v1157
    %1191 = vmatpush.msra.mxu0 %v1155
    %1192 = vmatpush.msra.mxu0 %v1153
    %1193 = vmatpush.msra.mxu0 %v1151
    %1194 = vmatmul.f32.gmra.mxu0 %v1176
    %v1195 = vpop.f32.mrf.mxu0
    %v1196 = vadd.f32 0.0, %v1195
    %1197 = vdwg.mxu0
    %1198 = vrot.lane.b32.xlu0 %v960, 80
    %v1199 = vpop.permute.xlu0 %1198
    %1200 = vrot.lane.b32.xlu0 %v961, 80
    %v1201 = vpop.permute.xlu0 %1200
    %1202 = vrot.lane.b32.xlu0 %v962, 80
    %v1203 = vpop.permute.xlu0 %1202
    %1204 = vrot.lane.b32.xlu0 %v963, 80
    %v1205 = vpop.permute.xlu0 %1204
    %v1211 = vsel %vm87, %v1132, 0
    %v1214 = vsel %vm87, %v1133, 0
    %1216 = vmatpush.msra.mxu0 0.0
    %1217 = vmatpush.msra.mxu0 0.0
    %1218 = vmatpush.msra.mxu0 0.0
    %1219 = vmatpush.msra.mxu0 0.0
    %1220 = vmatpush.msra.mxu0 0.0
    %1221 = vmatpush.msra.mxu0 0.0
    %1222 = vmatpush.msra.mxu0 0.0
    %1223 = vmatpush.msra.mxu0 0.0
    %1224 = vmatpush.msra.mxu0 0.0
    %1225 = vmatpush.msra.mxu0 0.0
    %1226 = vmatpush.msra.mxu0 0.0
    %1227 = vmatpush.msra.mxu0 0.0
    %1228 = vmatpush.msra.mxu0 %v1205
    %1229 = vmatpush.msra.mxu0 %v1203
    %1230 = vmatpush.msra.mxu0 %v1201
    %1231 = vmatpush.msra.mxu0 %v1199
    %1232 = vmatmul.f32.gmra.mxu0 %v1211
    %v1233 = vpop.f32.mrf.mxu0
    %v1234 = vadd.f32 0.0, %v1233
    %1235 = vmatmul.f32.gmra.mxu0 %v1214
    %v1236 = vpop.f32.mrf.mxu0
    %v1237 = vadd.f32 0.0, %v1236
    %1238 = vdwg.mxu0
    %v1240 = vrot.slane %v1196, 1
    %v1241 = vperm.slane %v1196, 0
    %v1242 = vperm.slane %v1240, 0
    %v1245 = vadd.f32 %v1234, %v1241
    %v1246 = vadd.f32 %v1237, %v1242
    %v1247 = vld [vmem:[%s3 + $0xf1] sm:$0x1]
    %v1248 = vperm.slane %v1247, 0
    %v1249 = vadd.f32 %v1245, %v1248
    %v1250 = vadd.f32 %v1246, %v1248
    %v1251 = vmax.f32 %v1249, 0.0
    %v1252 = vmax.f32 %v1250, 0.0
    %v1253 = vld [vmem:[%s3 + $0x70] sm:$0xff]
    %v1254 = vld [vmem:[%s3 + $0x78] sm:$0xff]
    %v1255 = vld [vmem:[%s3 + $0x80] sm:$0xff]
    %v1256 = vld [vmem:[%s3 + $0x88] sm:$0xff]
    %v1257 = vld [vmem:[%s3 + $0x90] sm:$0xff]
    %v1258 = vld [vmem:[%s3 + $0x98] sm:$0xff]
    %v1259 = vld [vmem:[%s3 + $0xa0] sm:$0xff]
    %v1260 = vld [vmem:[%s3 + $0xa8] sm:$0xff]
    %1269 = vrot.lane.b32.xlu0 %v1253, 64
    %v1270 = vpop.permute.xlu0 %1269
    %1271 = vrot.lane.b32.xlu0 %v1254, 64
    %v1272 = vpop.permute.xlu0 %1271
    %1273 = vrot.lane.b32.xlu0 %v1255, 64
    %v1274 = vpop.permute.xlu0 %1273
    %1275 = vrot.lane.b32.xlu0 %v1256, 64
    %v1276 = vpop.permute.xlu0 %1275
    %1277 = vrot.lane.b32.xlu0 %v1257, 64
    %v1278 = vpop.permute.xlu0 %1277
    %1279 = vrot.lane.b32.xlu0 %v1258, 64
    %v1280 = vpop.permute.xlu0 %1279
    %1281 = vrot.lane.b32.xlu0 %v1259, 64
    %v1282 = vpop.permute.xlu0 %1281
    %1283 = vrot.lane.b32.xlu0 %v1260, 64
    %v1284 = vpop.permute.xlu0 %1283
    %1294 = vrot.lane.b32.xlu0 %v1248, 64
    %v1295 = vpop.permute.xlu0 %1294
    %v1298 = vsel %vm1174, %v1251, 0
    %v1301 = vsel %vm1174, %v1252, 0
    %1303 = vmatpush.msra.mxu0 0.0
    %1304 = vmatpush.msra.mxu0 0.0
    %1305 = vmatpush.msra.mxu0 0.0
    %1306 = vmatpush.msra.mxu0 0.0
    %1307 = vmatpush.msra.mxu0 0.0
    %1308 = vmatpush.msra.mxu0 0.0
    %1309 = vmatpush.msra.mxu0 0.0
    %1310 = vmatpush.msra.mxu0 0.0
    %1311 = vmatpush.msra.mxu0 %v1284
    %1312 = vmatpush.msra.mxu0 %v1282
    %1313 = vmatpush.msra.mxu0 %v1280
    %1314 = vmatpush.msra.mxu0 %v1278
    %1315 = vmatpush.msra.mxu0 %v1276
    %1316 = vmatpush.msra.mxu0 %v1274
    %1317 = vmatpush.msra.mxu0 %v1272
    %1318 = vmatpush.msra.mxu0 %v1270
    %1319 = vmatmul.f32.gmra.mxu0 %v1298
    %v1320 = vpop.f32.mrf.mxu0
    %v1321 = vadd.f32 %v1295, %v1320
    %1322 = vmatmul.f32.gmra.mxu0 %v1301
    %v1323 = vpop.f32.mrf.mxu0
    %v1324 = vadd.f32 %v1295, %v1323
    %1325 = vdwg.mxu0
    %v1326 = vld [vmem:[%s3 + $0xb0] sm:$0xff]
    %v1327 = vld [vmem:[%s3 + $0xb8] sm:$0xff]
    %v1328 = vld [vmem:[%s3 + $0xc0] sm:$0xff]
    %v1329 = vld [vmem:[%s3 + $0xc8] sm:$0xff]
    %v1330 = vld [vmem:[%s3 + $0xd0] sm:$0xff]
    %v1331 = vld [vmem:[%s3 + $0xd8] sm:$0xff]
    %v1332 = vld [vmem:[%s3 + $0xe0] sm:$0xff]
    %v1333 = vld [vmem:[%s3 + $0xe8] sm:$0xff]
    %1334 = vrot.lane.b32.xlu0 %v965, 64
    %v1335 = vpop.permute.xlu0 %1334
    %v1338 = vsel %vm1174, %v1321, 0
    %v1341 = vsel %vm1174, %v1324, 0
    %1343 = vmatpush.msra.mxu0 0.0
    %1344 = vmatpush.msra.mxu0 0.0
    %1345 = vmatpush.msra.mxu0 0.0
    %1346 = vmatpush.msra.mxu0 0.0
    %1347 = vmatpush.msra.mxu0 0.0
    %1348 = vmatpush.msra.mxu0 0.0
    %1349 = vmatpush.msra.mxu0 0.0
    %1350 = vmatpush.msra.mxu0 0.0
    %1351 = vmatpush.msra.mxu0 %v1333
    %1352 = vmatpush.msra.mxu0 %v1332
    %1353 = vmatpush.msra.mxu0 %v1331
    %1354 = vmatpush.msra.mxu0 %v1330
    %1355 = vmatpush.msra.mxu0 %v1329
    %1356 = vmatpush.msra.mxu0 %v1328
    %1357 = vmatpush.msra.mxu0 %v1327
    %1358 = vmatpush.msra.mxu0 %v1326
    %1359 = vmatmul.f32.gmra.mxu0 %v1338
    %v1360 = vpop.f32.mrf.mxu0
    %v1361 = vadd.f32 %v1335, %v1360
    %1362 = vmatmul.f32.gmra.mxu0 %v1341
    %v1363 = vpop.f32.mrf.mxu0
    %v1364 = vadd.f32 %v1335, %v1363
    %1365 = vdwg.mxu0
    %v1366 = vmax.f32 %v1361, 0.0
    %v1367 = vmax.f32 %v1364, 0.0
    %1368 = vrot.lane.b32.xlu0 %v960, 8
    %v1369 = vpop.permute.xlu0 %1368
    %1370 = vrot.lane.b32.xlu0 %v961, 8
    %v1371 = vpop.permute.xlu0 %1370
    %1372 = vrot.lane.b32.xlu0 %v962, 8
    %v1373 = vpop.permute.xlu0 %1372
    %1374 = vrot.lane.b32.xlu0 %v963, 8
    %v1375 = vpop.permute.xlu0 %1374
    %1380 = vrot.lane.b32.xlu0 %v965, 8
    %v1381 = vpop.permute.xlu0 %1380
    %v1384 = vsel %vm87, %v1366, 0
    %v1387 = vsel %vm87, %v1367, 0
    %1389 = vmatpush.msra.mxu0 0.0
    %1390 = vmatpush.msra.mxu0 0.0
    %1391 = vmatpush.msra.mxu0 0.0
    %1392 = vmatpush.msra.mxu0 0.0
    %1393 = vmatpush.msra.mxu0 0.0
    %1394 = vmatpush.msra.mxu0 0.0
    %1395 = vmatpush.msra.mxu0 0.0
    %1396 = vmatpush.msra.mxu0 0.0
    %1397 = vmatpush.msra.mxu0 0.0
    %1398 = vmatpush.msra.mxu0 0.0
    %1399 = vmatpush.msra.mxu0 0.0
    %1400 = vmatpush.msra.mxu0 0.0
    %1401 = vmatpush.msra.mxu0 %v1375
    %1402 = vmatpush.msra.mxu0 %v1373
    %1403 = vmatpush.msra.mxu0 %v1371
    %1404 = vmatpush.msra.mxu0 %v1369
    %1405 = vmatmul.f32.gmra.mxu0 %v1384
    %v1406 = vpop.f32.mrf.mxu0
    %v1407 = vadd.f32 %v1381, %v1406
    %1408 = vmatmul.f32.gmra.mxu0 %v1387
    %v1409 = vpop.f32.mrf.mxu0
    %v1410 = vadd.f32 %v1381, %v1409
    %1411 = vdwg.mxu0
    %v1412 = vsel %vm1029, %v1407, -inf
    %v1413 = vrot.slane %v1412, 4
    %v1414 = vmax.f32 %v1412, %v1413
    %v1415 = vrot.slane %v1414, 2
    %v1416 = vmax.f32 %v1414, %v1415
    %v1417 = vrot.slane %v1416, 1
    %v1418 = vmax.f32 %v1416, %v1417
    %v1419 = vsel %vm1029, %v1410, -inf
    %v1420 = vrot.slane %v1419, 4
    %v1421 = vmax.f32 %v1419, %v1420
    %v1422 = vrot.slane %v1421, 2
    %v1423 = vmax.f32 %v1421, %v1422
    %v1424 = vrot.slane %v1423, 1
    %v1425 = vmax.f32 %v1423, %v1424
    %v1426 = vsub.f32 %v1407, %v1418
    %v1427 = vsub.f32 %v1410, %v1425
    %v1428 = vmul.f32 %v1426, 1.442695
    %v1429 = vpow.pop %v1428
    %v1430 = vmul.f32 %v1427, 1.442695
    %v1431 = vpow.pop %v1430
    %v1432 = vsel %vm1029, %v1429, 0.0
    %v1433 = vrot.slane %v1432, 4
    %v1434 = vadd.f32 %v1432, %v1433
    %v1435 = vrot.slane %v1434, 2
    %v1436 = vadd.f32 %v1434, %v1435
    %v1437 = vrot.slane %v1436, 1
    %v1438 = vadd.f32 %v1436, %v1437
    %v1439 = vsel %vm1029, %v1431, 0.0
    %v1440 = vrot.slane %v1439, 4
    %v1441 = vadd.f32 %v1439, %v1440
    %v1442 = vrot.slane %v1441, 2
    %v1443 = vadd.f32 %v1441, %v1442
    %v1444 = vrot.slane %v1443, 1
    %v1445 = vadd.f32 %v1443, %v1444
    %v1446 = vmax.f32 %v1438, 1e-30
    %v1447 = vmax.f32 %v1445, 1e-30
    %v1448 = vrcp.pop %v1446
    %v1449 = vrcp.pop %v1447
    %v1450 = vmul.f32 %v1429, %v1448
    %v1451 = vmul.f32 %v1431, %v1449
    %1453 = vset.pattern.permute.xlu0 0
    %1454 = vperm.xlu0 %1453, %v1450
    %v1455 = vpop.permute.xlu0 %1454
    %1458 = vset.pattern.permute.xlu0 0
    %1459 = vperm.xlu0 %1458, %v1451
    %v1460 = vpop.permute.xlu0 %1459
    %v1462 = vmul.f32 %v1455, %v1132
    %v1463 = vmul.f32 %v1460, %v1133
    %v1464 = vsel %vm87, %v1462, 0.0
    %v1465 = vrot.slane %v1464, 4
    %v1466 = vadd.f32 %v1464, %v1465
    %v1467 = vrot.slane %v1466, 2
    %v1468 = vadd.f32 %v1466, %v1467
    %v1469 = vrot.slane %v1468, 1
    %v1470 = vadd.f32 %v1468, %v1469
    %v1471 = vsel %vm87, %v1463, 0.0
    %v1472 = vrot.slane %v1471, 4
    %v1473 = vadd.f32 %v1471, %v1472
    %v1474 = vrot.slane %v1473, 2
    %v1475 = vadd.f32 %v1473, %v1474
    %v1476 = vrot.slane %v1475, 1
    %v1477 = vadd.f32 %v1475, %v1476
    %1478 = vset.pattern.permute.xlu0 1
    %1479 = vperm.xlu0 %1478, %v1450
    %v1480 = vpop.permute.xlu0 %1479
    %1482 = vset.pattern.permute.xlu0 1
    %1483 = vperm.xlu0 %1482, %v1451
    %v1484 = vpop.permute.xlu0 %1483
    %v1486 = vmul.f32 %v1480, %v1132
    %v1487 = vmul.f32 %v1484, %v1133
    %v1488 = vsel %vm87, %v1486, 0.0
    %v1489 = vrot.slane %v1488, 4
    %v1490 = vadd.f32 %v1488, %v1489
    %v1491 = vrot.slane %v1490, 2
    %v1492 = vadd.f32 %v1490, %v1491
    %v1493 = vrot.slane %v1492, 1
    %v1494 = vadd.f32 %v1492, %v1493
    %v1495 = vsel %vm87, %v1487, 0.0
    %v1496 = vrot.slane %v1495, 4
    %v1497 = vadd.f32 %v1495, %v1496
    %v1498 = vrot.slane %v1497, 2
    %v1499 = vadd.f32 %v1497, %v1498
    %v1500 = vrot.slane %v1499, 1
    %v1501 = vadd.f32 %v1499, %v1500
    %v1504 = vsel %vm1122, %v1477, %v1470
    %v1508 = vsel %vm1122, %v1501, %v1494
    %1509 = vrot.lane.b32.xlu0 %v1508, 32
    %v1510 = vpop.permute.xlu0 %1509
    %v1512 = vsel %vm87, %v1504, %v1510
    %1514 = vrot.lane.b32.xlu0 %v1512, 64
    %v1515 = vpop.permute.xlu0 %1514
    %v1517 = vsel %vm1174, %v1131, %v1515
    %v1518 = vld [vmem:[%s3 + $0x30] sm:$0xff]
    %v1519 = vld [vmem:[%s3 + $0x38] sm:$0xff]
    %v1520 = vld [vmem:[%s3 + $0x40] sm:$0xff]
    %v1521 = vld [vmem:[%s3 + $0x48] sm:$0xff]
    %v1522 = vld [vmem:[%s3 + $0x50] sm:$0xff]
    %v1523 = vld [vmem:[%s3 + $0x58] sm:$0xff]
    %v1524 = vld [vmem:[%s3 + $0x60] sm:$0xff]
    %v1525 = vld [vmem:[%s3 + $0x68] sm:$0xff]
    %1526 = vmatpush.msra.mxu0 %v1260
    %1527 = vmatpush.msra.mxu0 %v1259
    %1528 = vmatpush.msra.mxu0 %v1258
    %1529 = vmatpush.msra.mxu0 %v1257
    %1530 = vmatpush.msra.mxu0 %v1256
    %1531 = vmatpush.msra.mxu0 %v1255
    %1532 = vmatpush.msra.mxu0 %v1254
    %1533 = vmatpush.msra.mxu0 %v1253
    %1534 = vmatpush.msra.mxu0 %v1525
    %1535 = vmatpush.msra.mxu0 %v1524
    %1536 = vmatpush.msra.mxu0 %v1523
    %1537 = vmatpush.msra.mxu0 %v1522
    %1538 = vmatpush.msra.mxu0 %v1521
    %1539 = vmatpush.msra.mxu0 %v1520
    %1540 = vmatpush.msra.mxu0 %v1519
    %1541 = vmatpush.msra.mxu0 %v1518
    %1542 = vmatmul.f32.gmra.mxu0 %v1517
    %v1543 = vpop.f32.mrf.mxu0
    %v1544 = vadd.f32 %v965, %v1543
    %1545 = vdwg.mxu0
    %v1546 = vmax.f32 %v1544, 0.0
    %1555 = vrot.lane.b32.xlu0 %v1326, 96
    %v1556 = vpop.permute.xlu0 %1555
    %1557 = vrot.lane.b32.xlu0 %v1327, 96
    %v1558 = vpop.permute.xlu0 %1557
    %1559 = vrot.lane.b32.xlu0 %v1328, 96
    %v1560 = vpop.permute.xlu0 %1559
    %1561 = vrot.lane.b32.xlu0 %v1329, 96
    %v1562 = vpop.permute.xlu0 %1561
    %1563 = vrot.lane.b32.xlu0 %v1330, 96
    %v1564 = vpop.permute.xlu0 %1563
    %1565 = vrot.lane.b32.xlu0 %v1331, 96
    %v1566 = vpop.permute.xlu0 %1565
    %1567 = vrot.lane.b32.xlu0 %v1332, 96
    %v1568 = vpop.permute.xlu0 %1567
    %1569 = vrot.lane.b32.xlu0 %v1333, 96
    %v1570 = vpop.permute.xlu0 %1569
    %1579 = vrot.lane.b32.xlu0 %v965, 32
    %v1580 = vpop.permute.xlu0 %1579
    %v1583 = vsel %vm1174, %v1546, 0
    %1585 = vmatpush.msra.mxu0 0.0
    %1586 = vmatpush.msra.mxu0 0.0
    %1587 = vmatpush.msra.mxu0 0.0
    %1588 = vmatpush.msra.mxu0 0.0
    %1589 = vmatpush.msra.mxu0 0.0
    %1590 = vmatpush.msra.mxu0 0.0
    %1591 = vmatpush.msra.mxu0 0.0
    %1592 = vmatpush.msra.mxu0 0.0
    %1593 = vmatpush.msra.mxu0 %v1570
    %1594 = vmatpush.msra.mxu0 %v1568
    %1595 = vmatpush.msra.mxu0 %v1566
    %1596 = vmatpush.msra.mxu0 %v1564
    %1597 = vmatpush.msra.mxu0 %v1562
    %1598 = vmatpush.msra.mxu0 %v1560
    %1599 = vmatpush.msra.mxu0 %v1558
    %1600 = vmatpush.msra.mxu0 %v1556
    %1601 = vmatmul.f32.gmra.mxu0 %v1583
    %v1602 = vpop.f32.mrf.mxu0
    %v1603 = vadd.f32 %v1580, %v1602
    %1604 = vdwg.mxu0
    %vm1605 = vcmask 123904
    %v1606 = vsel %vm1605, %v1603, -inf
    %1607 = vmax.xlane.f32.xlu0 %v1606
    %v1608 = vpop.xlane.xlu0 %1607
    %v1609 = vsub.f32 %v1603, %v1608
    %v1610 = vmul.f32 %v1609, 1.442695
    %v1611 = vpow.pop %v1610
    %v1612 = vsel %vm1605, %v1611, 0.0
    %1613 = vadd.xlane.f32.xlu0 %v1612
    %v1614 = vpop.xlane.xlu0 %1613
    %v1615 = vlog2.pop %v1614
    %v1616 = vmul.f32 %v1615, 0.6931472
    %v1617 = vadd.f32 %v1608, %v1616
    %v1618 = vsub.f32 %v1603, %v1617
    %1619 = vst.msk [vmem:[#allocation8] sm:$0x3] %vm1605, %v1618
    // Predicated region
    $region26: #{attention_net_forward.1} parent=1 // pred_check
      _
    $region27: #{attention_net_forward.1} parent=1 // pred_check_branch
      %1621 = sbr.rel (0) target = $region29
    $region28: #{attention_net_forward.1} parent=1 // pred_region
      %1623 = vsyncadd [#allocation5], 0
      %s1625 = sshll.u32 [#allocation8], 4
      %s1626 = int_to_ptr.vmem [resolvable:$true] %s1625
      %s1627 = sshll.u32 %s4, 4
      %s1628 = int_to_ptr.hbm [resolvable:$true] %s1627
      %1630 = dma.vmem_to_hbm [thread:$0]  %s1626, 32, %s1628, [#allocation5]
    $region29: #{attention_net_forward.1} parent=1 // pred_fallthru
      _
    // Predicated region
    $region30: #{attention_net_forward.1} parent=1 // pred_check
      _
    $region31: #{attention_net_forward.1} parent=1 // pred_check_branch
      %1632 = sbr.rel (0) target = $region33
    $region32: #{attention_net_forward.1} parent=1 // pred_region
      %1634 = dma.done [#allocation5], 32
    $region33: #{attention_net_forward.1} parent=1 // pred_fallthru
      _
    %1635 = vsyncpa [#allocation4], 1
    %1636 = vsyncpa [#allocation5], 1
    %1637 = vsyncpa [#allocation6], 1

</llo_original>
